<compile_context>
chip_gen: v5e
topology: v5e:2x2
jax: 0.10.0
libtpu: 0.0.40
codegen_flags: <defaults>
</compile_context>

<pallas_src>
import functools

import jax
import jax.numpy as jnp
import numpy as np
from jax import lax
from jax.experimental import pallas as pl
from jax.experimental.pallas import tpu as pltpu


def _fold_bn(gamma, beta, mean, var, eps=1e-5):
    scale = gamma / jnp.sqrt(var + eps)
    return scale, beta - mean * scale


def _vmem_limit_bytes():
    """~75% of physical VMEM (capped), works for v5e/v6e (128 MiB) and v7x (64 MiB)."""
    try:
        cap = pltpu.get_tpu_info().vmem_capacity_bytes
    except Exception:
        cap = 64 << 20
    return int(min(cap * 3 // 4, 96 << 20))


def _pick_rows_per_tile(H, W, Cl, Ch, budget_bytes=20 << 20):
    """Largest divisor of H whose halo'd tile fits a conservative VMEM budget."""
    WP = W + 2
    C4 = 4 * Cl
    C4p = max(128, -(-C4 // 128) * 128)
    per_in_row = 2 * 2 * (C4 + 2 * Ch)            # lc + hq2, double-buffered, bf16
    per_out_row = 2 * 2 * C4p + 4 * C4p           # bf16 out (x2 bufs) + f32 acc
    best = 1
    for th in range(1, H + 1):
        if H % th:
            continue
        need = (th + 3) * WP * per_in_row + th * WP * per_out_row
        if need <= budget_bytes:
            best = th
    return best


# --------------------------------------------------------------------------- #
# Pallas kernel: one (batch, row-tile) per grid step.                         #
#                                                                             #
# Inputs are flattened padded base-grid slabs (TH+3 padded image rows per     #
# tile); every conv tap is a contiguous slab  ref[off : off + TM, :].         #
# acc_ref is a single f32 VMEM accumulator: 6 upsample matmuls (K = 2*Ch,     #
# column taps K-fused) + 4 attention matmuls (K = 4*Cl), att taps scaled by   #
# the per-batch channel gate.  Epilogue adds the effective bias, ReLUs and    #
# stores a lane-dense bf16 tile.                                              #
# --------------------------------------------------------------------------- #
def gau_kernel(lc_ref, hq_ref, gate_ref, bias_ref, wa_ref, wbp_ref, wbs_ref,
               out_ref, acc_ref, *, WP, TM):
    # ---- ConvTranspose2d(4,2,1) taps, K-fused along column offsets ----------
    for dr in range(3):
        base = dr * WP
        pair = hq_ref[0, 0, pl.ds(base, TM), :]                  # (TM, 2*Ch)
        d = jnp.dot(pair, wbp_ref[dr], preferred_element_type=jnp.float32)
        if dr == 0:
            acc_ref[...] = d                                     # init, no memset
        else:
            acc_ref[...] += d
        tail = hq_ref[0, 0, pl.ds(base + 2, TM), :]              # (TM, 2*Ch)
        acc_ref[...] += jnp.dot(tail, wbs_ref[dr],
                                preferred_element_type=jnp.float32)

    # ---- 3x3 conv on low (poly-phase), each tap scaled by the channel gate --
    gate = gate_ref[0]                                           # (1, C4p)
    for dr in (1, 2):
        for dc in (1, 2):
            slab = lc_ref[0, 0, pl.ds(dr * WP + dc, TM), :]      # (TM, 4*Cl)
            acc_ref[...] += jnp.dot(slab, wa_ref[dr - 1, dc - 1],
                                    preferred_element_type=jnp.float32) * gate

    # ---- epilogue: relu(up + att*gate + (b_up + b_low*gate)) ----------------
    out_ref[0, 0] = jnp.maximum(acc_ref[...] + bias_ref[0],
                                0.0).astype(out_ref.dtype)


# --------------------------------------------------------------------------- #
# Wrapper: layout conversion, poly-phase / K-fusion packing, BN folding,      #
# gate precompute, row tiling.                                                #
# --------------------------------------------------------------------------- #
def gau_forward(fms_high, fms_low, params, *, rows_per_tile=None):
    """fms_high: (B, Ch, H, W), fms_low: (B, Cl, 2H, 2W) -> (B, Cl, 2H, 2W)."""
    B, Ch, H, W = fms_high.shape
    Bl, Cl, H2, W2 = fms_low.shape
    assert Bl == B and H2 == 2 * H and W2 == 2 * W

    WP = W + 2                      # base-grid width (incl. 2 garbage columns)
    NR = (H + 3) * WP               # rows of the flattened padded inputs
    M = H * WP                      # rows of the flattened kernel output
    C4 = 4 * Cl                     # 4 output phases packed along channels
    C4p = max(128, -(-C4 // 128) * 128)   # lane-dense output width (>=128)
    Ch2 = 2 * Ch                    # column-pair packed high channels
    f32, bf16 = jnp.float32, jnp.bfloat16

    if rows_per_tile is None:
        rows_per_tile = _pick_rows_per_tile(H, W, Cl, Ch)
    TH = max(d for d in range(1, int(rows_per_tile) + 1) if H % d == 0)
    T = H // TH                     # number of row tiles
    TM = TH * WP                    # output base-grid rows per tile
    RT = (TH + 3) * WP              # input rows per tile (3 padded-row halo)

    sh, bh = _fold_bn(*params['bn_high'])
    sl, bl = _fold_bn(*params['bn_low'])
    su, bu = _fold_bn(*params['bn_up'])

    # -- channel gate (GAP + 1x1 conv + BN + ReLU): tiny gemv, done in XLA ----
    gp = jnp.mean(fms_high.astype(f32), axis=(2, 3))               # (B, Ch)
    w1s = (params['w1'][:, :, 0, 0] * sh[:, None]).T               # (Ch, Cl)
    gate_cl = jnp.maximum(gp @ w1s + bh[None, :], 0.0)             # (B, Cl)
    gate_c4 = jnp.tile(gate_cl, (1, 4))                            # (B, 4Cl)
    bias_c4 = jnp.tile(bu, 4)[None, :] + jnp.tile(bl, 4)[None, :] * gate_c4
    pad_c = ((0, 0), (0, C4p - C4))
    gate = jnp.pad(gate_c4, pad_c).reshape(B, 1, C4p).astype(f32)
    bias_eff = jnp.pad(bias_c4, pad_c).reshape(B, 1, C4p).astype(f32)

    # -- high features: NHWC, pad (1,2,1,1), flatten, pack adjacent column pair
    high = jnp.transpose(fms_high, (0, 2, 3, 1)).astype(f32)       # (B,H,W,Ch)
    hq = jnp.pad(high, ((0, 0), (1, 2), (1, 1), (0, 0)))           # (B,H+3,WP,Ch)
    hq_flat = hq.reshape(B, NR, Ch)
    hq2 = jnp.concatenate(
        [hq_flat, jnp.pad(hq_flat[:, 1:], ((0, 0), (0, 1), (0, 0)))],
        axis=-1).astype(bf16)                                      # (B,NR,2Ch)

    # -- low features: poly-phase split, phase-specific padding, channel pack -
    low = jnp.transpose(fms_low, (0, 2, 3, 1)).astype(f32)         # (B,2H,2W,Cl)
    phases = []
    for pi in (0, 1):
        for pj in (0, 1):                                          # block q = 2*pi+pj
            lp = low[:, pi::2, pj::2, :]                           # (B,H,W,Cl)
            pt = 1 if pi == 0 else 2
            plft = 1 if pj == 0 else 2
            phases.append(jnp.pad(
                lp, ((0, 0), (pt, 3 - pt), (plft, 2 - plft), (0, 0))))
    lc_flat = jnp.concatenate(phases, axis=-1).reshape(B, NR, C4).astype(bf16)

    # -- row tiles with a 3-padded-row halo duplicated per tile (3/TH overhead)
    row_idx = np.arange(T)[:, None] * TM + np.arange(RT)[None, :]  # (T, RT)
    lc_t = jnp.take(lc_flat, row_idx, axis=1)                      # (B,T,RT,C4)
    hq_t = jnp.take(hq2, row_idx, axis=1)                          # (B,T,RT,2Ch)

    # -- weights: fold BN scales, pack per slab offset ------------------------
    # 3x3 conv: WA[dr-1, dc-1] maps the 4 input phases (K=4Cl) to the padded
    # output phases (N=C4p) for slab offset (dr, dc) in {1,2}^2.
    w3 = params['w3']                                              # (Cl,Cl,3,3)
    WA = jnp.zeros((2, 2, C4, C4p), f32)
    for pr in (0, 1):
        for ky in range(3):
            t = pr + ky - 1
            pi = t % 2
            dr = (t - pi) // 2 + (1 if pi == 0 else 2)
            for pc in (0, 1):
                for kx in range(3):
                    s = pc + kx - 1
                    pj = s % 2
                    dc = (s - pj) // 2 + (1 if pj == 0 else 2)
                    blk = (w3[:, :, ky, kx] * sl[:, None]).T       # (Cl_in,Cl_out)
                    WA = WA.at[dr - 1, dc - 1,
                               (2 * pi + pj) * Cl:(2 * pi + pj + 1) * Cl,
                               (2 * pr + pc) * Cl:(2 * pr + pc + 1) * Cl].set(blk)
    WA = WA.astype(bf16)

    # ConvTranspose2d(4,2,1): WB[dr, dc] maps Ch -> padded output phases for
    # slab offset (dr, dc) in {0,1,2}^2; then K-fuse column taps:
    #   WBp[dr] pairs (dc=0, dc=1)  -> K = 2*Ch  (slab offset dr*WP)
    #   WBs[dr] is dc=2 zero-padded -> K = 2*Ch  (slab offset dr*WP + 2)
    wu = params['wup']                                             # (Ch,Cl,4,4)
    taps = {0: ((1, 0), (3, -1)), 1: ((0, 1), (2, 0))}             # parity -> (k, d)
    WB = jnp.zeros((3, 3, Ch, C4p), f32)
    for pr in (0, 1):
        for ky, di in taps[pr]:
            for pc in (0, 1):
                for kx, dj in taps[pc]:
                    blk = wu[:, :, ky, kx] * su[None, :]           # (Ch, Cl)
                    WB = WB.at[di + 1, dj + 1, :,
                               (2 * pr + pc) * Cl:(2 * pr + pc + 1) * Cl].set(blk)
    WBp = jnp.concatenate([WB[:, 0], WB[:, 1]], axis=1).astype(bf16)   # (3,2Ch,C4p)
    WBs = jnp.concatenate([WB[:, 2], jnp.zeros((3, Ch, C4p), f32)],
                          axis=1).astype(bf16)                         # (3,2Ch,C4p)

    out_t = pl.pallas_call(
        functools.partial(gau_kernel, WP=WP, TM=TM),
        out_shape=jax.ShapeDtypeStruct((B, T, TM, C4p), bf16),
        grid=(B, T),
        in_specs=[
            pl.BlockSpec((1, 1, RT, C4), lambda b, t: (b, t, 0, 0)),
            pl.BlockSpec((1, 1, RT, Ch2), lambda b, t: (b, t, 0, 0)),
            pl.BlockSpec((1, 1, C4p), lambda b, t: (b, 0, 0)),
            pl.BlockSpec((1, 1, C4p), lambda b, t: (b, 0, 0)),
            pl.BlockSpec((2, 2, C4, C4p), lambda b, t: (0, 0, 0, 0)),
            pl.BlockSpec((3, Ch2, C4p), lambda b, t: (0, 0, 0)),
            pl.BlockSpec((3, Ch2, C4p), lambda b, t: (0, 0, 0)),
        ],
        out_specs=pl.BlockSpec((1, 1, TM, C4p), lambda b, t: (b, t, 0, 0)),
        scratch_shapes=[pltpu.VMEM((TM, C4p), jnp.float32)],
        compiler_params=pltpu.CompilerParams(
            dimension_semantics=("parallel", "parallel"),
            vmem_limit_bytes=_vmem_limit_bytes()),
    )(lc_t, hq_t, gate, bias_eff, WA, WBp, WBs)

    # (B,T,TM,C4p) -> drop lane pad / garbage cols, interleave phases -> NCHW.
    out = out_t[..., :C4].reshape(B, M, C4)
    out = out.reshape(B, H, WP, 2, 2, Cl)[:, :, :W]
    out = jnp.transpose(out, (0, 5, 1, 3, 2, 4)).reshape(B, Cl, H2, W2)
    return out.astype(jnp.float32)


# --------------------------------------------------------------------------- #
# Pure-JAX reference (NCHW, XLA convs) used only for verification.            #
# --------------------------------------------------------------------------- #
def gau_reference(fms_high, fms_low, params):
    dn = ('NCHW', 'OIHW', 'NCHW')
    sh, bh = _fold_bn(*params['bn_high'])
    sl, bl = _fold_bn(*params['bn_low'])
    su, bu = _fold_bn(*params['bn_up'])

    gp = jnp.mean(fms_high, axis=(2, 3), keepdims=True)
    g = lax.conv_general_dilated(gp, params['w1'], (1, 1), 'VALID',
                                 dimension_numbers=dn)
    g = jnp.maximum(g * sh[None, :, None, None] + bh[None, :, None, None], 0.0)

    lm = lax.conv_general_dilated(fms_low, params['w3'], (1, 1),
                                  ((1, 1), (1, 1)), dimension_numbers=dn)
    lm = lm * sl[None, :, None, None] + bl[None, :, None, None]
    att = lm * g

    wflip = jnp.transpose(params['wup'], (1, 0, 2, 3))[:, :, ::-1, ::-1]
    up = lax.conv_general_dilated(fms_high, wflip, (1, 1), ((2, 2), (2, 2)),
                                  lhs_dilation=(2, 2), dimension_numbers=dn)
    up = up * su[None, :, None, None] + bu[None, :, None, None]
    return jnp.maximum(up + att, 0.0)


# --------------------------------------------------------------------------- #
if __name__ == "__main__":
    key = jax.random.PRNGKey(0)
    ks = jax.random.split(key, 8)

    B, Ch, Cl, H, W = 2, 16, 8, 8, 8           # fms_low is (B, Cl, 2H, 2W)
    # Activations pre-rounded to bf16 so the kernel (bf16 MXU operands) and the
    # f32 XLA reference see identical inputs; remaining delta is bf16 rounding
    # of BN-folded weights and the bf16 output store (f32 accumulation inside).
    fms_high = jax.random.normal(ks[0], (B, Ch, H, W), jnp.float32)
    fms_high = fms_high.astype(jnp.bfloat16).astype(jnp.float32)
    fms_low = jax.random.normal(ks[1], (B, Cl, 2 * H, 2 * W), jnp.float32)
    fms_low = fms_low.astype(jnp.bfloat16).astype(jnp.float32)

    def bn_init(k):
        k1, k2, k3, k4 = jax.random.split(k, 4)
        gamma = 1.0 + 0.1 * jax.random.normal(k1, (Cl,), jnp.float32)
        beta = 0.1 * jax.random.normal(k2, (Cl,), jnp.float32)
        rmean = 0.1 * jax.random.normal(k3, (Cl,), jnp.float32)
        rvar = 0.5 + jax.random.uniform(k4, (Cl,), jnp.float32)
        return (gamma, beta, rmean, rvar)

    params = {
        'w1': 0.2 * jax.random.normal(ks[2], (Cl, Ch, 1, 1), jnp.float32),
        'w3': 0.2 * jax.random.normal(ks[3], (Cl, Cl, 3, 3), jnp.float32),
        'wup': 0.2 * jax.random.normal(ks[4], (Ch, Cl, 4, 4), jnp.float32),
        'bn_high': bn_init(ks[5]),
        'bn_low': bn_init(ks[6]),
        'bn_up': bn_init(ks[7]),
    }

    # rows_per_tile=4 -> grid (B, 2): exercises the halo'd row-tile axis.
    out = jax.block_until_ready(
        gau_forward(fms_high, fms_low, params, rows_per_tile=4))
    ref = jax.block_until_ready(gau_reference(fms_high, fms_low, params))

    assert out.shape == (B, Cl, 2 * H, 2 * W)
    np.testing.assert_allclose(np.asarray(out), np.asarray(ref),
                               rtol=2e-2, atol=2e-2)
    print("KERNEL_OK")
</pallas_src>

<mosaic_0001>
module attributes {stable_mosaic.version = 11 : i64} {
  func.func @gau_kernel(%arg0: i32, %arg1: i32, %arg2: memref<1x1x70x32xbf16, #tpu.memory_space<vmem>>, %arg3: memref<1x1x70x32xbf16, #tpu.memory_space<vmem>>, %arg4: memref<1x1x128xf32, #tpu.memory_space<vmem>>, %arg5: memref<1x1x128xf32, #tpu.memory_space<vmem>>, %arg6: memref<2x2x32x128xbf16, #tpu.memory_space<vmem>>, %arg7: memref<3x32x128xbf16, #tpu.memory_space<vmem>>, %arg8: memref<3x32x128xbf16, #tpu.memory_space<vmem>>, %arg9: memref<1x1x40x128xbf16, #tpu.memory_space<vmem>>, %arg10: memref<40x128xf32, #tpu.memory_space<vmem>>) attributes {dimension_semantics = [#tpu.dimension_semantics<parallel>, #tpu.dimension_semantics<parallel>], iteration_bounds = array<i64: 2, 2>, scalar_prefetch = 0 : i64, scratch_operands = 1 : i64, tpu.core_type = #tpu.core_type<tc>, window_params = [{transform_indices = @transform_0, window_bounds = array<i64: 1, 1, 70, 32>}, {transform_indices = @transform_1, window_bounds = array<i64: 1, 1, 70, 32>}, {transform_indices = @transform_2, window_bounds = array<i64: 1, 1, 128>}, {transform_indices = @transform_3, window_bounds = array<i64: 1, 1, 128>}, {pipeline_mode = #tpu.pipeline_mode<synchronous>, transform_indices = @transform_4, window_bounds = array<i64: 2, 2, 32, 128>}, {pipeline_mode = #tpu.pipeline_mode<synchronous>, transform_indices = @transform_5, window_bounds = array<i64: 3, 32, 128>}, {pipeline_mode = #tpu.pipeline_mode<synchronous>, transform_indices = @transform_6, window_bounds = array<i64: 3, 32, 128>}, {transform_indices = @transform_7, window_bounds = array<i64: 1, 1, 40, 128>}]} {
    %c0 = arith.constant 0 : index
    %c0_0 = arith.constant 0 : index
    %c0_1 = arith.constant 0 : index
    %c0_2 = arith.constant 0 : index
    %0 = vector.load %arg3[%c0, %c0_0, %c0_1, %c0_2] : memref<1x1x70x32xbf16, #tpu.memory_space<vmem>>, vector<1x1x40x32xbf16>
    %1 = vector.shape_cast %0 : vector<1x1x40x32xbf16> to vector<40x32xbf16>
    %c0_3 = arith.constant 0 : index
    %c0_4 = arith.constant 0 : index
    %c0_5 = arith.constant 0 : index
    %2 = vector.load %arg7[%c0_3, %c0_4, %c0_5] : memref<3x32x128xbf16, #tpu.memory_space<vmem>>, vector<1x32x128xbf16>
    %3 = vector.shape_cast %2 : vector<1x32x128xbf16> to vector<32x128xbf16>
    %cst = arith.constant dense<0.000000e+00> : vector<40x128xf32>
    %4 = tpu.matmul %1, %3, %cst {dimension_numbers = #tpu.dot_dimension_numbers<[1], [0], [0], [1], [0, 0, 1, 1], [], []>} : vector<40x32xbf16>, vector<32x128xbf16>, vector<40x128xf32> -> vector<40x128xf32>
    %c0_6 = arith.constant 0 : index
    %c0_7 = arith.constant 0 : index
    %5 = vector.load %arg10[%c0_6, %c0_7] : memref<40x128xf32, #tpu.memory_space<vmem>>, vector<40x128xf32>
    tpu.vector_store %arg10[%c0_6, %c0_7], %4 {strides = array<i32>} : memref<40x128xf32, #tpu.memory_space<vmem>>, vector<40x128xf32>,
    %c0_8 = arith.constant 0 : index
    %c0_9 = arith.constant 0 : index
    %c2 = arith.constant 2 : index
    %c0_10 = arith.constant 0 : index
    %6 = vector.load %arg3[%c0_8, %c0_9, %c2, %c0_10] : memref<1x1x70x32xbf16, #tpu.memory_space<vmem>>, vector<1x1x40x32xbf16>
    %7 = vector.shape_cast %6 : vector<1x1x40x32xbf16> to vector<40x32xbf16>
    %c0_11 = arith.constant 0 : index
    %c0_12 = arith.constant 0 : index
    %8 = vector.load %arg10[%c0_11, %c0_12] : memref<40x128xf32, #tpu.memory_space<vmem>>, vector<40x128xf32>
    %c0_13 = arith.constant 0 : index
    %c0_14 = arith.constant 0 : index
    %c0_15 = arith.constant 0 : index
    %9 = vector.load %arg8[%c0_13, %c0_14, %c0_15] : memref<3x32x128xbf16, #tpu.memory_space<vmem>>, vector<1x32x128xbf16>
    %10 = vector.shape_cast %9 : vector<1x32x128xbf16> to vector<32x128xbf16>
    %cst_16 = arith.constant dense<0.000000e+00> : vector<40x128xf32>
    %11 = tpu.matmul %7, %10, %cst_16 {dimension_numbers = #tpu.dot_dimension_numbers<[1], [0], [0], [1], [0, 0, 1, 1], [], []>} : vector<40x32xbf16>, vector<32x128xbf16>, vector<40x128xf32> -> vector<40x128xf32>
    %12 = arith.addf %8, %11 : vector<40x128xf32>
    %c0_17 = arith.constant 0 : index
    %c0_18 = arith.constant 0 : index
    %13 = vector.load %arg10[%c0_17, %c0_18] : memref<40x128xf32, #tpu.memory_space<vmem>>, vector<40x128xf32>
    tpu.vector_store %arg10[%c0_17, %c0_18], %12 {strides = array<i32>} : memref<40x128xf32, #tpu.memory_space<vmem>>, vector<40x128xf32>,
    %c0_19 = arith.constant 0 : index
    %c0_20 = arith.constant 0 : index
    %c10 = arith.constant 10 : index
    %c0_21 = arith.constant 0 : index
    %14 = vector.load %arg3[%c0_19, %c0_20, %c10, %c0_21] : memref<1x1x70x32xbf16, #tpu.memory_space<vmem>>, vector<1x1x40x32xbf16>
    %15 = vector.shape_cast %14 : vector<1x1x40x32xbf16> to vector<40x32xbf16>
    %c1 = arith.constant 1 : index
    %c0_22 = arith.constant 0 : index
    %c0_23 = arith.constant 0 : index
    %16 = vector.load %arg7[%c1, %c0_22, %c0_23] : memref<3x32x128xbf16, #tpu.memory_space<vmem>>, vector<1x32x128xbf16>
    %17 = vector.shape_cast %16 : vector<1x32x128xbf16> to vector<32x128xbf16>
    %cst_24 = arith.constant dense<0.000000e+00> : vector<40x128xf32>
    %18 = tpu.matmul %15, %17, %cst_24 {dimension_numbers = #tpu.dot_dimension_numbers<[1], [0], [0], [1], [0, 0, 1, 1], [], []>} : vector<40x32xbf16>, vector<32x128xbf16>, vector<40x128xf32> -> vector<40x128xf32>
    %c0_25 = arith.constant 0 : index
    %c0_26 = arith.constant 0 : index
    %19 = vector.load %arg10[%c0_25, %c0_26] : memref<40x128xf32, #tpu.memory_space<vmem>>, vector<40x128xf32>
    %20 = arith.addf %19, %18 : vector<40x128xf32>
    %c0_27 = arith.constant 0 : index
    %c0_28 = arith.constant 0 : index
    %21 = vector.load %arg10[%c0_27, %c0_28] : memref<40x128xf32, #tpu.memory_space<vmem>>, vector<40x128xf32>
    tpu.vector_store %arg10[%c0_27, %c0_28], %20 {strides = array<i32>} : memref<40x128xf32, #tpu.memory_space<vmem>>, vector<40x128xf32>,
    %c0_29 = arith.constant 0 : index
    %c0_30 = arith.constant 0 : index
    %c12 = arith.constant 12 : index
    %c0_31 = arith.constant 0 : index
    %22 = vector.load %arg3[%c0_29, %c0_30, %c12, %c0_31] : memref<1x1x70x32xbf16, #tpu.memory_space<vmem>>, vector<1x1x40x32xbf16>
    %23 = vector.shape_cast %22 : vector<1x1x40x32xbf16> to vector<40x32xbf16>
    %c0_32 = arith.constant 0 : index
    %c0_33 = arith.constant 0 : index
    %24 = vector.load %arg10[%c0_32, %c0_33] : memref<40x128xf32, #tpu.memory_space<vmem>>, vector<40x128xf32>
    %c1_34 = arith.constant 1 : index
    %c0_35 = arith.constant 0 : index
    %c0_36 = arith.constant 0 : index
    %25 = vector.load %arg8[%c1_34, %c0_35, %c0_36] : memref<3x32x128xbf16, #tpu.memory_space<vmem>>, vector<1x32x128xbf16>
    %26 = vector.shape_cast %25 : vector<1x32x128xbf16> to vector<32x128xbf16>
    %cst_37 = arith.constant dense<0.000000e+00> : vector<40x128xf32>
    %27 = tpu.matmul %23, %26, %cst_37 {dimension_numbers = #tpu.dot_dimension_numbers<[1], [0], [0], [1], [0, 0, 1, 1], [], []>} : vector<40x32xbf16>, vector<32x128xbf16>, vector<40x128xf32> -> vector<40x128xf32>
    %28 = arith.addf %24, %27 : vector<40x128xf32>
    %c0_38 = arith.constant 0 : index
    %c0_39 = arith.constant 0 : index
    %29 = vector.load %arg10[%c0_38, %c0_39] : memref<40x128xf32, #tpu.memory_space<vmem>>, vector<40x128xf32>
    tpu.vector_store %arg10[%c0_38, %c0_39], %28 {strides = array<i32>} : memref<40x128xf32, #tpu.memory_space<vmem>>, vector<40x128xf32>,
    %c0_40 = arith.constant 0 : index
    %c0_41 = arith.constant 0 : index
    %c20 = arith.constant 20 : index
    %c0_42 = arith.constant 0 : index
    %30 = vector.load %arg3[%c0_40, %c0_41, %c20, %c0_42] : memref<1x1x70x32xbf16, #tpu.memory_space<vmem>>, vector<1x1x40x32xbf16>
    %31 = vector.shape_cast %30 : vector<1x1x40x32xbf16> to vector<40x32xbf16>
    %c2_43 = arith.constant 2 : index
    %c0_44 = arith.constant 0 : index
    %c0_45 = arith.constant 0 : index
    %32 = vector.load %arg7[%c2_43, %c0_44, %c0_45] : memref<3x32x128xbf16, #tpu.memory_space<vmem>>, vector<1x32x128xbf16>
    %33 = vector.shape_cast %32 : vector<1x32x128xbf16> to vector<32x128xbf16>
    %cst_46 = arith.constant dense<0.000000e+00> : vector<40x128xf32>
    %34 = tpu.matmul %31, %33, %cst_46 {dimension_numbers = #tpu.dot_dimension_numbers<[1], [0], [0], [1], [0, 0, 1, 1], [], []>} : vector<40x32xbf16>, vector<32x128xbf16>, vector<40x128xf32> -> vector<40x128xf32>
    %c0_47 = arith.constant 0 : index
    %c0_48 = arith.constant 0 : index
    %35 = vector.load %arg10[%c0_47, %c0_48] : memref<40x128xf32, #tpu.memory_space<vmem>>, vector<40x128xf32>
    %36 = arith.addf %35, %34 : vector<40x128xf32>
    %c0_49 = arith.constant 0 : index
    %c0_50 = arith.constant 0 : index
    %37 = vector.load %arg10[%c0_49, %c0_50] : memref<40x128xf32, #tpu.memory_space<vmem>>, vector<40x128xf32>
    tpu.vector_store %arg10[%c0_49, %c0_50], %36 {strides = array<i32>} : memref<40x128xf32, #tpu.memory_space<vmem>>, vector<40x128xf32>,
    %c0_51 = arith.constant 0 : index
    %c0_52 = arith.constant 0 : index
    %c22 = arith.constant 22 : index
    %c0_53 = arith.constant 0 : index
    %38 = vector.load %arg3[%c0_51, %c0_52, %c22, %c0_53] : memref<1x1x70x32xbf16, #tpu.memory_space<vmem>>, vector<1x1x40x32xbf16>
    %39 = vector.shape_cast %38 : vector<1x1x40x32xbf16> to vector<40x32xbf16>
    %c0_54 = arith.constant 0 : index
    %c0_55 = arith.constant 0 : index
    %40 = vector.load %arg10[%c0_54, %c0_55] : memref<40x128xf32, #tpu.memory_space<vmem>>, vector<40x128xf32>
    %c2_56 = arith.constant 2 : index
    %c0_57 = arith.constant 0 : index
    %c0_58 = arith.constant 0 : index
    %41 = vector.load %arg8[%c2_56, %c0_57, %c0_58] : memref<3x32x128xbf16, #tpu.memory_space<vmem>>, vector<1x32x128xbf16>
    %42 = vector.shape_cast %41 : vector<1x32x128xbf16> to vector<32x128xbf16>
    %cst_59 = arith.constant dense<0.000000e+00> : vector<40x128xf32>
    %43 = tpu.matmul %39, %42, %cst_59 {dimension_numbers = #tpu.dot_dimension_numbers<[1], [0], [0], [1], [0, 0, 1, 1], [], []>} : vector<40x32xbf16>, vector<32x128xbf16>, vector<40x128xf32> -> vector<40x128xf32>
    %44 = arith.addf %40, %43 : vector<40x128xf32>
    %c0_60 = arith.constant 0 : index
    %c0_61 = arith.constant 0 : index
    %45 = vector.load %arg10[%c0_60, %c0_61] : memref<40x128xf32, #tpu.memory_space<vmem>>, vector<40x128xf32>
    tpu.vector_store %arg10[%c0_60, %c0_61], %44 {strides = array<i32>} : memref<40x128xf32, #tpu.memory_space<vmem>>, vector<40x128xf32>,
    %c0_62 = arith.constant 0 : index
    %c0_63 = arith.constant 0 : index
    %c0_64 = arith.constant 0 : index
    %46 = vector.load %arg4[%c0_62, %c0_63, %c0_64] : memref<1x1x128xf32, #tpu.memory_space<vmem>>, vector<1x1x128xf32>
    %47 = vector.shape_cast %46 : vector<1x1x128xf32> to vector<1x128xf32>
    %c0_65 = arith.constant 0 : index
    %c0_66 = arith.constant 0 : index
    %c11 = arith.constant 11 : index
    %c0_67 = arith.constant 0 : index
    %48 = vector.load %arg2[%c0_65, %c0_66, %c11, %c0_67] : memref<1x1x70x32xbf16, #tpu.memory_space<vmem>>, vector<1x1x40x32xbf16>
    %49 = vector.shape_cast %48 : vector<1x1x40x32xbf16> to vector<40x32xbf16>
    %c0_68 = arith.constant 0 : index
    %c0_69 = arith.constant 0 : index
    %50 = vector.load %arg10[%c0_68, %c0_69] : memref<40x128xf32, #tpu.memory_space<vmem>>, vector<40x128xf32>
    %c0_70 = arith.constant 0 : index
    %c0_71 = arith.constant 0 : index
    %c0_72 = arith.constant 0 : index
    %c0_73 = arith.constant 0 : index
    %51 = vector.load %arg6[%c0_70, %c0_71, %c0_72, %c0_73] : memref<2x2x32x128xbf16, #tpu.memory_space<vmem>>, vector<1x1x32x128xbf16>
    %52 = vector.shape_cast %51 : vector<1x1x32x128xbf16> to vector<32x128xbf16>
    %cst_74 = arith.constant dense<0.000000e+00> : vector<40x128xf32>
    %53 = tpu.matmul %49, %52, %cst_74 {dimension_numbers = #tpu.dot_dimension_numbers<[1], [0], [0], [1], [0, 0, 1, 1], [], []>} : vector<40x32xbf16>, vector<32x128xbf16>, vector<40x128xf32> -> vector<40x128xf32>
    %54 = vector.broadcast %47 : vector<1x128xf32> to vector<40x128xf32>
    %55 = arith.mulf %53, %54 : vector<40x128xf32>
    %56 = arith.addf %50, %55 : vector<40x128xf32>
    %c0_75 = arith.constant 0 : index
    %c0_76 = arith.constant 0 : index
    %57 = vector.load %arg10[%c0_75, %c0_76] : memref<40x128xf32, #tpu.memory_space<vmem>>, vector<40x128xf32>
    tpu.vector_store %arg10[%c0_75, %c0_76], %56 {strides = array<i32>} : memref<40x128xf32, #tpu.memory_space<vmem>>, vector<40x128xf32>,
    %c0_77 = arith.constant 0 : index
    %c0_78 = arith.constant 0 : index
    %c12_79 = arith.constant 12 : index
    %c0_80 = arith.constant 0 : index
    %58 = vector.load %arg2[%c0_77, %c0_78, %c12_79, %c0_80] : memref<1x1x70x32xbf16, #tpu.memory_space<vmem>>, vector<1x1x40x32xbf16>
    %59 = vector.shape_cast %58 : vector<1x1x40x32xbf16> to vector<40x32xbf16>
    %c0_81 = arith.constant 0 : index
    %c0_82 = arith.constant 0 : index
    %60 = vector.load %arg10[%c0_81, %c0_82] : memref<40x128xf32, #tpu.memory_space<vmem>>, vector<40x128xf32>
    %c0_83 = arith.constant 0 : index
    %c1_84 = arith.constant 1 : index
    %c0_85 = arith.constant 0 : index
    %c0_86 = arith.constant 0 : index
    %61 = vector.load %arg6[%c0_83, %c1_84, %c0_85, %c0_86] : memref<2x2x32x128xbf16, #tpu.memory_space<vmem>>, vector<1x1x32x128xbf16>
    %62 = vector.shape_cast %61 : vector<1x1x32x128xbf16> to vector<32x128xbf16>
    %cst_87 = arith.constant dense<0.000000e+00> : vector<40x128xf32>
    %63 = tpu.matmul %59, %62, %cst_87 {dimension_numbers = #tpu.dot_dimension_numbers<[1], [0], [0], [1], [0, 0, 1, 1], [], []>} : vector<40x32xbf16>, vector<32x128xbf16>, vector<40x128xf32> -> vector<40x128xf32>
    %64 = vector.broadcast %47 : vector<1x128xf32> to vector<40x128xf32>
    %65 = arith.mulf %63, %64 : vector<40x128xf32>
    %66 = arith.addf %60, %65 : vector<40x128xf32>
    %c0_88 = arith.constant 0 : index
    %c0_89 = arith.constant 0 : index
    %67 = vector.load %arg10[%c0_88, %c0_89] : memref<40x128xf32, #tpu.memory_space<vmem>>, vector<40x128xf32>
    tpu.vector_store %arg10[%c0_88, %c0_89], %66 {strides = array<i32>} : memref<40x128xf32, #tpu.memory_space<vmem>>, vector<40x128xf32>,
    %c0_90 = arith.constant 0 : index
    %c0_91 = arith.constant 0 : index
    %c21 = arith.constant 21 : index
    %c0_92 = arith.constant 0 : index
    %68 = vector.load %arg2[%c0_90, %c0_91, %c21, %c0_92] : memref<1x1x70x32xbf16, #tpu.memory_space<vmem>>, vector<1x1x40x32xbf16>
    %69 = vector.shape_cast %68 : vector<1x1x40x32xbf16> to vector<40x32xbf16>
    %c0_93 = arith.constant 0 : index
    %c0_94 = arith.constant 0 : index
    %70 = vector.load %arg10[%c0_93, %c0_94] : memref<40x128xf32, #tpu.memory_space<vmem>>, vector<40x128xf32>
    %c1_95 = arith.constant 1 : index
    %c0_96 = arith.constant 0 : index
    %c0_97 = arith.constant 0 : index
    %c0_98 = arith.constant 0 : index
    %71 = vector.load %arg6[%c1_95, %c0_96, %c0_97, %c0_98] : memref<2x2x32x128xbf16, #tpu.memory_space<vmem>>, vector<1x1x32x128xbf16>
    %72 = vector.shape_cast %71 : vector<1x1x32x128xbf16> to vector<32x128xbf16>
    %cst_99 = arith.constant dense<0.000000e+00> : vector<40x128xf32>
    %73 = tpu.matmul %69, %72, %cst_99 {dimension_numbers = #tpu.dot_dimension_numbers<[1], [0], [0], [1], [0, 0, 1, 1], [], []>} : vector<40x32xbf16>, vector<32x128xbf16>, vector<40x128xf32> -> vector<40x128xf32>
    %74 = vector.broadcast %47 : vector<1x128xf32> to vector<40x128xf32>
    %75 = arith.mulf %73, %74 : vector<40x128xf32>
    %76 = arith.addf %70, %75 : vector<40x128xf32>
    %c0_100 = arith.constant 0 : index
    %c0_101 = arith.constant 0 : index
    %77 = vector.load %arg10[%c0_100, %c0_101] : memref<40x128xf32, #tpu.memory_space<vmem>>, vector<40x128xf32>
    tpu.vector_store %arg10[%c0_100, %c0_101], %76 {strides = array<i32>} : memref<40x128xf32, #tpu.memory_space<vmem>>, vector<40x128xf32>,
    %c0_102 = arith.constant 0 : index
    %c0_103 = arith.constant 0 : index
    %c22_104 = arith.constant 22 : index
    %c0_105 = arith.constant 0 : index
    %78 = vector.load %arg2[%c0_102, %c0_103, %c22_104, %c0_105] : memref<1x1x70x32xbf16, #tpu.memory_space<vmem>>, vector<1x1x40x32xbf16>
    %79 = vector.shape_cast %78 : vector<1x1x40x32xbf16> to vector<40x32xbf16>
    %c0_106 = arith.constant 0 : index
    %c0_107 = arith.constant 0 : index
    %80 = vector.load %arg10[%c0_106, %c0_107] : memref<40x128xf32, #tpu.memory_space<vmem>>, vector<40x128xf32>
    %c1_108 = arith.constant 1 : index
    %c1_109 = arith.constant 1 : index
    %c0_110 = arith.constant 0 : index
    %c0_111 = arith.constant 0 : index
    %81 = vector.load %arg6[%c1_108, %c1_109, %c0_110, %c0_111] : memref<2x2x32x128xbf16, #tpu.memory_space<vmem>>, vector<1x1x32x128xbf16>
    %82 = vector.shape_cast %81 : vector<1x1x32x128xbf16> to vector<32x128xbf16>
    %cst_112 = arith.constant dense<0.000000e+00> : vector<40x128xf32>
    %83 = tpu.matmul %79, %82, %cst_112 {dimension_numbers = #tpu.dot_dimension_numbers<[1], [0], [0], [1], [0, 0, 1, 1], [], []>} : vector<40x32xbf16>, vector<32x128xbf16>, vector<40x128xf32> -> vector<40x128xf32>
    %84 = vector.broadcast %47 : vector<1x128xf32> to vector<40x128xf32>
    %85 = arith.mulf %83, %84 : vector<40x128xf32>
    %86 = arith.addf %80, %85 : vector<40x128xf32>
    %c0_113 = arith.constant 0 : index
    %c0_114 = arith.constant 0 : index
    %87 = vector.load %arg10[%c0_113, %c0_114] : memref<40x128xf32, #tpu.memory_space<vmem>>, vector<40x128xf32>
    tpu.vector_store %arg10[%c0_113, %c0_114], %86 {strides = array<i32>} : memref<40x128xf32, #tpu.memory_space<vmem>>, vector<40x128xf32>,
    %c0_115 = arith.constant 0 : index
    %c0_116 = arith.constant 0 : index
    %88 = vector.load %arg10[%c0_115, %c0_116] : memref<40x128xf32, #tpu.memory_space<vmem>>, vector<40x128xf32>
    %c0_117 = arith.constant 0 : index
    %c0_118 = arith.constant 0 : index
    %c0_119 = arith.constant 0 : index
    %89 = vector.load %arg5[%c0_117, %c0_118, %c0_119] : memref<1x1x128xf32, #tpu.memory_space<vmem>>, vector<1x1x128xf32>
    %90 = vector.shape_cast %89 : vector<1x1x128xf32> to vector<1x128xf32>
    %91 = vector.broadcast %90 : vector<1x128xf32> to vector<40x128xf32>
    %92 = arith.addf %88, %91 : vector<40x128xf32>
    %cst_120 = arith.constant 0.000000e+00 : f32
    %93 = vector.broadcast %cst_120 : f32 to vector<40x128xf32>
    %94 = arith.maximumf %92, %93 : vector<40x128xf32>
    %95 = arith.truncf %94 : vector<40x128xf32> to vector<40x128xbf16>
    %c0_121 = arith.constant 0 : index
    %c0_122 = arith.constant 0 : index
    %c0_123 = arith.constant 0 : index
    %c0_124 = arith.constant 0 : index
    %96 = vector.load %arg9[%c0_121, %c0_122, %c0_123, %c0_124] : memref<1x1x40x128xbf16, #tpu.memory_space<vmem>>, vector<1x1x40x128xbf16>
    %97 = vector.shape_cast %96 : vector<1x1x40x128xbf16> to vector<40x128xbf16>
    %98 = vector.shape_cast %95 : vector<40x128xbf16> to vector<1x1x40x128xbf16>
    tpu.vector_store %arg9[%c0_121, %c0_122, %c0_123, %c0_124], %98 {strides = array<i32>} : memref<1x1x40x128xbf16, #tpu.memory_space<vmem>>, vector<1x1x40x128xbf16>,
    return
  }
  func.func @transform_0(%arg0: i32, %arg1: i32) -> (i32, i32, i32, i32) {
    %c0_i32 = arith.constant 0 : i32
    %c0_i32_0 = arith.constant 0 : i32
    %c0_i32_1 = arith.constant 0 : i32
    return %arg0, %arg1, %c0_i32, %c0_i32_0 : i32, i32, i32, i32
  }
  func.func @transform_1(%arg0: i32, %arg1: i32) -> (i32, i32, i32, i32) {
    %c0_i32 = arith.constant 0 : i32
    %c0_i32_0 = arith.constant 0 : i32
    %c0_i32_1 = arith.constant 0 : i32
    return %arg0, %arg1, %c0_i32, %c0_i32_0 : i32, i32, i32, i32
  }
  func.func @transform_2(%arg0: i32, %arg1: i32) -> (i32, i32, i32) {
    %c0_i32 = arith.constant 0 : i32
    %c0_i32_0 = arith.constant 0 : i32
    %c0_i32_1 = arith.constant 0 : i32
    return %arg0, %c0_i32, %c0_i32_0 : i32, i32, i32
  }
  func.func @transform_3(%arg0: i32, %arg1: i32) -> (i32, i32, i32) {
    %c0_i32 = arith.constant 0 : i32
    %c0_i32_0 = arith.constant 0 : i32
    %c0_i32_1 = arith.constant 0 : i32
    return %arg0, %c0_i32, %c0_i32_0 : i32, i32, i32
  }
  func.func @transform_4(%arg0: i32, %arg1: i32) -> (i32, i32, i32, i32) {
    %c0_i32 = arith.constant 0 : i32
    %c0_i32_0 = arith.constant 0 : i32
    %c0_i32_1 = arith.constant 0 : i32
    %c0_i32_2 = arith.constant 0 : i32
    %c0_i32_3 = arith.constant 0 : i32
    return %c0_i32, %c0_i32_0, %c0_i32_1, %c0_i32_2 : i32, i32, i32, i32
  }
  func.func @transform_5(%arg0: i32, %arg1: i32) -> (i32, i32, i32) {
    %c0_i32 = arith.constant 0 : i32
    %c0_i32_0 = arith.constant 0 : i32
    %c0_i32_1 = arith.constant 0 : i32
    %c0_i32_2 = arith.constant 0 : i32
    return %c0_i32, %c0_i32_0, %c0_i32_1 : i32, i32, i32
  }
  func.func @transform_6(%arg0: i32, %arg1: i32) -> (i32, i32, i32) {
    %c0_i32 = arith.constant 0 : i32
    %c0_i32_0 = arith.constant 0 : i32
    %c0_i32_1 = arith.constant 0 : i32
    %c0_i32_2 = arith.constant 0 : i32
    return %c0_i32, %c0_i32_0, %c0_i32_1 : i32, i32, i32
  }
  func.func @transform_7(%arg0: i32, %arg1: i32) -> (i32, i32, i32, i32) {
    %c0_i32 = arith.constant 0 : i32
    %c0_i32_0 = arith.constant 0 : i32
    %c0_i32_1 = arith.constant 0 : i32
    return %arg0, %arg1, %c0_i32, %c0_i32_0 : i32, i32, i32, i32
  }
}

</mosaic_0001>

<llo_original>
// kernel: tpu_custom_call.1
$region0: #{tpu_custom_call.1}
  #allocation0 [shape = 'u32[]', space=smem, size = 0x4, offset = 0x4, fixed_abs, tag = 'smem constant byte address 0x4 - core index']
  #allocation1 [shape = 'u32[72,128]{1,0:T(1,128)}', space=vmem, size = 0x9000, scoped, tag = 'internal scratch']
  #allocation2 [shape = 'f32[40,128]{1,0:T(8,128)}', space=vmem, size = 0x5000, scoped, tag = 'scratch operand']
  %s0 = inlined_call_operand.vmem [shape: bf16[2,2,70,32], index: 0, kind: input, shape index: {}]
  %s1 = inlined_call_operand.vmem [shape: bf16[2,2,70,32], index: 1, kind: input, shape index: {}]
  %s2 = inlined_call_operand.vmem [shape: f32[2,1,128], index: 2, kind: input, shape index: {}]
  %s3 = inlined_call_operand.vmem [shape: f32[2,1,128], index: 3, kind: input, shape index: {}]
  %s4 = inlined_call_operand.vmem [shape: bf16[2,2,32,128], index: 4, kind: input, shape index: {}]
  %s5 = inlined_call_operand.vmem [shape: bf16[3,32,128], index: 5, kind: input, shape index: {}]
  %s6 = inlined_call_operand.vmem [shape: bf16[3,32,128], index: 6, kind: input, shape index: {}]
  %s7 = inlined_call_operand.hbm [shape: bf16[2,2,40,128], index: 7, kind: output, shape index: {}]
  %s8 = sld [smem:[#allocation0]]
  $region61: #{tpu_custom_call.1} parent=0
    _
  %s10 = ssub.s32 1, %s8
  %s11 = scalar_select 0, %s10, %s8
  $region1: #{tpu_custom_call.1} parent=0
    #allocation3 [shape = 'u8[20480]{0}', space=vmem, size = 0x5000, scoped, tag = 'output window, operand 0']
    #allocation4 [shape = 's32[2]{0}', space=sflag, size = 0x8, scoped, tag = 'scoped memory for tpu_custom_call.1']
    %12 = vsyncpa [#allocation4], 0
    %s13 = scalar_lea.sflag [#allocation4], 1
    %14 = vsyncpa %s13, 0
    loop: start=0, step=1, limit=6
    $region2: #{tpu_custom_call.1} parent=1 // loop_pre_header
      _
    $region3: #{tpu_custom_call.1} parent=1 // loop_header
      %s16 = sphi 0, %s20
      %p17 = scmp.ge.s32.totalorder %s16, 6
      %s23 = sphi 0, %s35
      %s24 = sphi 0, %s31
      %s25 = sphi 0, %s23
      %s26 = sphi 0, %s24
      %s27 = sphi 0, %s25
      %s28 = sphi 0, %s26
      %s40 = sphi 0, %s42
      %s43 = sphi 0, %s40
      %s44 = sphi 0, %s43
      %s60 = sphi 0, %s44
      %s68 = sphi 0, %s70
      %s71 = sphi 0, %s68
      %s72 = sphi 0, %s71
      %s88 = sphi 0, %s72
      %s94 = sphi 0, %s96
      %s97 = sphi 0, %s94
      %s98 = sphi 0, %s97
      %s114 = sphi 0, %s98
      %s120 = sphi 0, %s122
      %s123 = sphi 0, %s120
      %s124 = sphi 0, %s123
      %s140 = sphi 0, %s124
      %s144 = sphi 0, %s144
      %s146 = sphi 0, %s144
      %s147 = sphi 0, %s146
      %s161 = sphi 0, %s147
      %s165 = sphi 0, %s165
      %s167 = sphi 0, %s165
      %s168 = sphi 0, %s167
      %s182 = sphi 0, %s168
      %s186 = sphi 0, %s186
      %s188 = sphi 0, %s186
      %s189 = sphi 0, %s188
      %s203 = sphi 0, %s189
      %s211 = sphi 0, %s213
      %s214 = sphi 0, %s211
      %s215 = sphi 0, %s214
      %s231 = sphi 0, %s215
    $region4: #{tpu_custom_call.1} parent=1 // loop_header_branch
      %19 = sbr.rel (%p17) target = $region8
    $region5: #{tpu_custom_call.1} parent=1 // loop_body
      %s21 = ssub.s32 %s16, 1
      %s22 = ssub.s32 %s16, 2
      %s29 = sadd.s32 1, %s24
      %p30 = scmp.ge.s32.totalorder %s29, 2
      %s31 = scalar_select %p30, 0, %s29
      %s32 = sadd.s32 1, %s23
      %s33 = scalar_select %p30, %s32, %s23
      %p34 = scmp.ge.s32.totalorder %s33, 2
      %s35 = scalar_select %p34, 0, %s33
      %s36 = ssub.s32 %s23, %s35
      %s37 = ssub.s32 %s24, %s31
      %s38 = sor.u32 %s36, %s37
      %p39 = scmp.eq.s32.totalorder %s38, 0
      %s41 = sadd.s32 %s40, 1
      %s42 = scalar_select %p39, %s40, %s41
      %p45 = pneg %p39
      %p46 = scmp.eq.s32.totalorder %s16, 3
      %p47 = por %p45, %p46
      %p48 = scmp.ne.s32.totalorder %s40, %s43
      %p49 = scmp.eq.s32.totalorder %s16, 0
      %p50 = por %p48, %p49
      %p51 = scmp.ne.s32.totalorder %s40, %s43
      %p52 = scmp.eq.s32.totalorder %s21, 3
      %p53 = por %p51, %p52
      %p54 = scmp.ne.s32.totalorder %s43, %s44
      %p55 = scmp.eq.s32.totalorder %s21, 0
      %p56 = por %p54, %p55
      %p57 = scmp.ne.s32.totalorder %s43, %s44
      %p58 = scmp.eq.s32.totalorder %s22, 3
      %p59 = por %p57, %p58
      %p61 = scmp.ne.s32.totalorder %s44, %s60
      %p62 = scmp.eq.s32.totalorder %s22, 0
      %p63 = por %p61, %p62
      %s64 = ssub.s32 %s23, %s35
      %s65 = ssub.s32 %s24, %s31
      %s66 = sor.u32 %s64, %s65
      %p67 = scmp.eq.s32.totalorder %s66, 0
      %s69 = sadd.s32 %s68, 1
      %s70 = scalar_select %p67, %s68, %s69
      %p73 = pneg %p67
      %p74 = scmp.eq.s32.totalorder %s16, 3
      %p75 = por %p73, %p74
      %p76 = scmp.ne.s32.totalorder %s68, %s71
      %p77 = scmp.eq.s32.totalorder %s16, 0
      %p78 = por %p76, %p77
      %p79 = scmp.ne.s32.totalorder %s68, %s71
      %p80 = scmp.eq.s32.totalorder %s21, 3
      %p81 = por %p79, %p80
      %p82 = scmp.ne.s32.totalorder %s71, %s72
      %p83 = scmp.eq.s32.totalorder %s21, 0
      %p84 = por %p82, %p83
      %p85 = scmp.ne.s32.totalorder %s71, %s72
      %p86 = scmp.eq.s32.totalorder %s22, 3
      %p87 = por %p85, %p86
      %p89 = scmp.ne.s32.totalorder %s72, %s88
      %p90 = scmp.eq.s32.totalorder %s22, 0
      %p91 = por %p89, %p90
      %s92 = ssub.s32 %s23, %s35
      %p93 = scmp.eq.s32.totalorder %s92, 0
      %s95 = sadd.s32 %s94, 1
      %s96 = scalar_select %p93, %s94, %s95
      %p99 = pneg %p93
      %p100 = scmp.eq.s32.totalorder %s16, 3
      %p101 = por %p99, %p100
      %p102 = scmp.ne.s32.totalorder %s94, %s97
      %p103 = scmp.eq.s32.totalorder %s16, 0
      %p104 = por %p102, %p103
      %p105 = scmp.ne.s32.totalorder %s94, %s97
      %p106 = scmp.eq.s32.totalorder %s21, 3
      %p107 = por %p105, %p106
      %p108 = scmp.ne.s32.totalorder %s97, %s98
      %p109 = scmp.eq.s32.totalorder %s21, 0
      %p110 = por %p108, %p109
      %p111 = scmp.ne.s32.totalorder %s97, %s98
      %p112 = scmp.eq.s32.totalorder %s22, 3
      %p113 = por %p111, %p112
      %p115 = scmp.ne.s32.totalorder %s98, %s114
      %p116 = scmp.eq.s32.totalorder %s22, 0
      %p117 = por %p115, %p116
      %s118 = ssub.s32 %s23, %s35
      %p119 = scmp.eq.s32.totalorder %s118, 0
      %s121 = sadd.s32 %s120, 1
      %s122 = scalar_select %p119, %s120, %s121
      %p125 = pneg %p119
      %p126 = scmp.eq.s32.totalorder %s16, 3
      %p127 = por %p125, %p126
      %p128 = scmp.ne.s32.totalorder %s120, %s123
      %p129 = scmp.eq.s32.totalorder %s16, 0
      %p130 = por %p128, %p129
      %p131 = scmp.ne.s32.totalorder %s120, %s123
      %p132 = scmp.eq.s32.totalorder %s21, 3
      %p133 = por %p131, %p132
      %p134 = scmp.ne.s32.totalorder %s123, %s124
      %p135 = scmp.eq.s32.totalorder %s21, 0
      %p136 = por %p134, %p135
      %p137 = scmp.ne.s32.totalorder %s123, %s124
      %p138 = scmp.eq.s32.totalorder %s22, 3
      %p139 = por %p137, %p138
      %p141 = scmp.ne.s32.totalorder %s124, %s140
      %p142 = scmp.eq.s32.totalorder %s22, 0
      %p143 = por %p141, %p142
      %s145 = sadd.s32 %s144, 1
      %p148 = scmp.eq.s32.totalorder %s16, 3
      %p149 = scmp.ne.s32.totalorder %s144, %s146
      %p150 = scmp.eq.s32.totalorder %s16, 0
      %p151 = por %p149, %p150
      %p152 = scmp.ne.s32.totalorder %s144, %s146
      %p153 = scmp.eq.s32.totalorder %s21, 3
      %p154 = por %p152, %p153
      %p155 = scmp.ne.s32.totalorder %s146, %s147
      %p156 = scmp.eq.s32.totalorder %s21, 0
      %p157 = por %p155, %p156
      %p158 = scmp.ne.s32.totalorder %s146, %s147
      %p159 = scmp.eq.s32.totalorder %s22, 3
      %p160 = por %p158, %p159
      %p162 = scmp.ne.s32.totalorder %s147, %s161
      %p163 = scmp.eq.s32.totalorder %s22, 0
      %p164 = por %p162, %p163
      %s166 = sadd.s32 %s165, 1
      %p169 = scmp.eq.s32.totalorder %s16, 3
      %p170 = scmp.ne.s32.totalorder %s165, %s167
      %p171 = scmp.eq.s32.totalorder %s16, 0
      %p172 = por %p170, %p171
      %p173 = scmp.ne.s32.totalorder %s165, %s167
      %p174 = scmp.eq.s32.totalorder %s21, 3
      %p175 = por %p173, %p174
      %p176 = scmp.ne.s32.totalorder %s167, %s168
      %p177 = scmp.eq.s32.totalorder %s21, 0
      %p178 = por %p176, %p177
      %p179 = scmp.ne.s32.totalorder %s167, %s168
      %p180 = scmp.eq.s32.totalorder %s22, 3
      %p181 = por %p179, %p180
      %p183 = scmp.ne.s32.totalorder %s168, %s182
      %p184 = scmp.eq.s32.totalorder %s22, 0
      %p185 = por %p183, %p184
      %s187 = sadd.s32 %s186, 1
      %p190 = scmp.eq.s32.totalorder %s16, 3
      %p191 = scmp.ne.s32.totalorder %s186, %s188
      %p192 = scmp.eq.s32.totalorder %s16, 0
      %p193 = por %p191, %p192
      %p194 = scmp.ne.s32.totalorder %s186, %s188
      %p195 = scmp.eq.s32.totalorder %s21, 3
      %p196 = por %p194, %p195
      %p197 = scmp.ne.s32.totalorder %s188, %s189
      %p198 = scmp.eq.s32.totalorder %s21, 0
      %p199 = por %p197, %p198
      %p200 = scmp.ne.s32.totalorder %s188, %s189
      %p201 = scmp.eq.s32.totalorder %s22, 3
      %p202 = por %p200, %p201
      %p204 = scmp.ne.s32.totalorder %s189, %s203
      %p205 = scmp.eq.s32.totalorder %s22, 0
      %p206 = por %p204, %p205
      %s207 = ssub.s32 %s23, %s35
      %s208 = ssub.s32 %s24, %s31
      %s209 = sor.u32 %s207, %s208
      %p210 = scmp.eq.s32.totalorder %s209, 0
      %s212 = sadd.s32 %s211, 1
      %s213 = scalar_select %p210, %s211, %s212
      %p216 = pneg %p210
      %p217 = scmp.eq.s32.totalorder %s16, 3
      %p218 = por %p216, %p217
      %p219 = scmp.ne.s32.totalorder %s211, %s214
      %p220 = scmp.eq.s32.totalorder %s16, 0
      %p221 = por %p219, %p220
      %p222 = scmp.ne.s32.totalorder %s211, %s214
      %p223 = scmp.eq.s32.totalorder %s21, 3
      %p224 = por %p222, %p223
      %p225 = scmp.ne.s32.totalorder %s214, %s215
      %p226 = scmp.eq.s32.totalorder %s21, 0
      %p227 = por %p225, %p226
      %p228 = scmp.ne.s32.totalorder %s214, %s215
      %p229 = scmp.eq.s32.totalorder %s22, 3
      %p230 = por %p228, %p229
      %p232 = scmp.ne.s32.totalorder %s215, %s231
      %p233 = scmp.eq.s32.totalorder %s22, 0
      %p234 = por %p232, %p233
      %p235 = scmp.le.s32.totalorder 1, %s16
      %p236 = scmp.lt.s32.totalorder %s16, 5
      %p237 = pnand %p235, %p236
      %p238 = pneg %p237
      // Predicated region
      $region9: #{tpu_custom_call.1} parent=5 // pred_check
        _
      $region10: #{tpu_custom_call.1} parent=5 // pred_check_branch
        %240 = sbr.rel (%p237) target = $region12
      $region11: #{tpu_custom_call.1} parent=5 // pred_region
        %s241 = ssub.s32 %s16, 1
        // Predicated region
        $region13: #{tpu_custom_call.1} parent=11 // pred_check
          %p242 = pneg %p157
        $region14: #{tpu_custom_call.1} parent=11 // pred_check_branch
          %244 = sbr.rel (%p242) target = $region16
        $region15: #{tpu_custom_call.1} parent=11 // pred_region
          _
        $region16: #{tpu_custom_call.1} parent=11 // pred_fallthru
          _
        // Predicated region
        $region17: #{tpu_custom_call.1} parent=11 // pred_check
          %p245 = pneg %p178
        $region18: #{tpu_custom_call.1} parent=11 // pred_check_branch
          %247 = sbr.rel (%p245) target = $region20
        $region19: #{tpu_custom_call.1} parent=11 // pred_region
          _
        $region20: #{tpu_custom_call.1} parent=11 // pred_fallthru
          _
        // Predicated region
        $region21: #{tpu_custom_call.1} parent=11 // pred_check
          %p248 = pneg %p199
        $region22: #{tpu_custom_call.1} parent=11 // pred_check_branch
          %250 = sbr.rel (%p248) target = $region24
        $region23: #{tpu_custom_call.1} parent=11 // pred_region
          _
        $region24: #{tpu_custom_call.1} parent=11 // pred_fallthru
          _
      $region12: #{tpu_custom_call.1} parent=5 // pred_fallthru
        _
      %p251 = scmp.lt.s32.totalorder %s16, 4
      // Predicated region
      $region25: #{tpu_custom_call.1} parent=5 // pred_check
        %p252 = pneg %p251
      $region26: #{tpu_custom_call.1} parent=5 // pred_check_branch
        %254 = sbr.rel (%p252) target = $region28
      $region27: #{tpu_custom_call.1} parent=5 // pred_region
        // Predicated region
        $region29: #{tpu_custom_call.1} parent=27 // pred_check
          %p255 = pneg %p50
        $region30: #{tpu_custom_call.1} parent=27 // pred_check_branch
          %257 = sbr.rel (%p255) target = $region32
        $region31: #{tpu_custom_call.1} parent=27 // pred_region
          %p258 = scmp.lt.s32.totalorder %s23, 1
          %s259 = scalar_select %p258, %s23, 1
          %p260 = scmp.lt.s32.totalorder %s24, 1
          %s261 = scalar_select %p260, %s24, 1
          %s262 = smul.addr %s261, 9
          %s263 = smul.addr %s259, 18
          %s264 = sadd.s32 %s262, %s263
          %s265 = smul.addr %s264, 4
          %s266 = scalar_lea.vmem %s0, %s265
        $region32: #{tpu_custom_call.1} parent=27 // pred_fallthru
          _
        // Predicated region
        $region33: #{tpu_custom_call.1} parent=27 // pred_check
          %p267 = pneg %p78
        $region34: #{tpu_custom_call.1} parent=27 // pred_check_branch
          %269 = sbr.rel (%p267) target = $region36
        $region35: #{tpu_custom_call.1} parent=27 // pred_region
          %p270 = scmp.lt.s32.totalorder %s23, 1
          %s271 = scalar_select %p270, %s23, 1
          %p272 = scmp.lt.s32.totalorder %s24, 1
          %s273 = scalar_select %p272, %s24, 1
          %s274 = smul.addr %s273, 9
          %s275 = smul.addr %s271, 18
          %s276 = sadd.s32 %s274, %s275
          %s277 = smul.addr %s276, 4
          %s278 = scalar_lea.vmem %s1, %s277
        $region36: #{tpu_custom_call.1} parent=27 // pred_fallthru
          _
        // Predicated region
        $region37: #{tpu_custom_call.1} parent=27 // pred_check
          %p279 = pneg %p104
        $region38: #{tpu_custom_call.1} parent=27 // pred_check_branch
          %281 = sbr.rel (%p279) target = $region40
        $region39: #{tpu_custom_call.1} parent=27 // pred_region
          %p282 = scmp.lt.s32.totalorder %s23, 1
          %s283 = scalar_select %p282, %s23, 1
          %s284 = scalar_lea.vmem %s2, %s283
        $region40: #{tpu_custom_call.1} parent=27 // pred_fallthru
          _
        // Predicated region
        $region41: #{tpu_custom_call.1} parent=27 // pred_check
          %p285 = pneg %p130
        $region42: #{tpu_custom_call.1} parent=27 // pred_check_branch
          %287 = sbr.rel (%p285) target = $region44
        $region43: #{tpu_custom_call.1} parent=27 // pred_region
          %p288 = scmp.lt.s32.totalorder %s23, 1
          %s289 = scalar_select %p288, %s23, 1
          %s290 = scalar_lea.vmem %s3, %s289
        $region44: #{tpu_custom_call.1} parent=27 // pred_fallthru
          _
      $region28: #{tpu_custom_call.1} parent=5 // pred_fallthru
        _
      %p291 = scmp.le.s32.totalorder 1, %s16
      %p292 = scmp.lt.s32.totalorder %s16, 5
      %p293 = pnand %p291, %p292
      %p294 = pneg %p293
      // Predicated region
      $region45: #{tpu_custom_call.1} parent=5 // pred_check
        _
      $region46: #{tpu_custom_call.1} parent=5 // pred_check_branch
        %296 = sbr.rel (%p293) target = $region48
      $region47: #{tpu_custom_call.1} parent=5 // pred_region
        %s297 = ssub.s32 %s16, 1
        %p298 = scmp.lt.s32.totalorder %s25, 1
        %s299 = scalar_select %p298, %s25, 1
        %p300 = scmp.lt.s32.totalorder %s26, 1
        %s301 = scalar_select %p300, %s26, 1
        %s302 = smul.addr %s301, 9
        %s303 = smul.addr %s299, 18
        %s304 = sadd.s32 %s302, %s303
        %s305 = smul.addr %s304, 4
        %s306 = scalar_lea.vmem %s0, %s305
        %p307 = pneg %p56
        %p308 = pneg %p53
        %p309 = scmp.lt.s32.totalorder %s25, 1
        %s310 = scalar_select %p309, %s25, 1
        %p311 = scmp.lt.s32.totalorder %s26, 1
        %s312 = scalar_select %p311, %s26, 1
        %s313 = smul.addr %s312, 9
        %s314 = smul.addr %s310, 18
        %s315 = sadd.s32 %s313, %s314
        %s316 = smul.addr %s315, 4
        %s317 = scalar_lea.vmem %s1, %s316
        %p318 = pneg %p84
        %p319 = pneg %p81
        %p320 = scmp.lt.s32.totalorder %s25, 1
        %s321 = scalar_select %p320, %s25, 1
        %s322 = scalar_lea.vmem %s2, %s321
        %p323 = pneg %p110
        %p324 = pneg %p107
        %p325 = scmp.lt.s32.totalorder %s25, 1
        %s326 = scalar_select %p325, %s25, 1
        %s327 = scalar_lea.vmem %s3, %s326
        %p328 = pneg %p136
        %p329 = pneg %p133
        %p330 = pneg %p157
        %p331 = pneg %p154
        %p332 = pneg %p178
        %p333 = pneg %p175
        %p334 = pneg %p199
        %p335 = pneg %p196
        %p336 = pneg %p227
        %p337 = pneg %p224
        %s338 = sand.u32 %s214, 1
        %s339 = scalar_lea.sflag [#allocation4], %s338
        %s340 = sand.u32 %s214, 1
        %s341 = smul.addr %s340, 20
        %s342 = scalar_lea.vmem [#allocation3], %s341
        %p343 = scmp.lt.s32.totalorder %s25, 1
        %s344 = scalar_select %p343, %s25, 1
        %p345 = scmp.lt.s32.totalorder %s26, 1
        %s346 = scalar_select %p345, %s26, 1
        %s347 = smul.addr %s346, 9
        %s348 = smul.addr %s344, 18
        %s349 = sadd.s32 %s347, %s348
        %s350 = smul.addr %s349, 4
        %s351 = scalar_lea.vmem %s0, %s350
        %p352 = scmp.lt.s32.totalorder %s25, 1
        %s353 = scalar_select %p352, %s25, 1
        %p354 = scmp.lt.s32.totalorder %s26, 1
        %s355 = scalar_select %p354, %s26, 1
        %s356 = smul.addr %s355, 9
        %s357 = smul.addr %s353, 18
        %s358 = sadd.s32 %s356, %s357
        %s359 = smul.addr %s358, 4
        %s360 = scalar_lea.vmem %s1, %s359
        %p361 = scmp.lt.s32.totalorder %s25, 1
        %s362 = scalar_select %p361, %s25, 1
        %s363 = scalar_lea.vmem %s2, %s362
        %p364 = scmp.lt.s32.totalorder %s25, 1
        %s365 = scalar_select %p364, %s25, 1
        %s366 = scalar_lea.vmem %s3, %s365
        %v368 = vld [vmem:[%s360] sm:$0xf]
        %v369 = vld [vmem:[%s360 + $0x4] sm:$0xf]
        %v370 = vld [vmem:[%s360 + $0x8] sm:$0xf]
        %v371 = vld [vmem:[%s360 + $0xc] sm:$0xf]
        %v372 = vld [vmem:[%s360 + $0x10] sm:$0xf]
        %v373 = vld [vmem:[%s5] sm:$0xf]
        %v374 = vld [vmem:[%s5 + $0x4] sm:$0xf]
        %v375 = vld [vmem:[%s5 + $0x8] sm:$0xf]
        %v376 = vld [vmem:[%s5 + $0xc] sm:$0xf]
        %v382 = vunpack.c.l.b16 %v368
        %v383 = vunpack.c.l.b16 %v369
        %v384 = vunpack.c.l.b16 %v370
        %v385 = vunpack.c.l.b16 %v371
        %v386 = vunpack.c.l.b16 %v372
        %v387 = vpack.c.b16 %v383, %v382
        %v388 = vpack.c.b16 %v385, %v384
        %v389 = vpack.c.b16 %v386, %v386
        %v394 = vunpack.c.l.b16 %v373
        %v395 = vunpack.c.l.b16 %v374
        %v396 = vunpack.c.l.b16 %v375
        %v397 = vunpack.c.l.b16 %v376
        %v398 = vpack.c.b16 %v395, %v394
        %v399 = vpack.c.b16 %v397, %v396
        %vm402 = vcmask 261120
        %v404 = vsel %vm402, %v387, 0
        %v407 = vsel %vm402, %v388, 0
        %v410 = vsel %vm402, %v389, 0
        %412 = vmatpush.bf16.msra.mxu0 0
        %413 = vmatpush.bf16.msra.mxu0 0
        %414 = vmatpush.bf16.msra.mxu0 0
        %415 = vmatpush.bf16.msra.mxu0 0
        %416 = vmatpush.bf16.msra.mxu0 0
        %417 = vmatpush.bf16.msra.mxu0 0
        %418 = vmatpush.bf16.msra.mxu0 %v399
        %419 = vmatpush.bf16.msra.mxu0 %v398
        %420 = vmatmul.bf16.gmra.mxu0 %v404
        %v421 = vpop.f32.mrf.mxu0
        %v422 = vadd.f32 0.0, %v421
        %v423 = vpop.f32.mrf.mxu0
        %v424 = vadd.f32 0.0, %v423
        %425 = vmatmul.bf16.gmra.mxu0 %v407
        %v426 = vpop.f32.mrf.mxu0
        %v427 = vadd.f32 0.0, %v426
        %v428 = vpop.f32.mrf.mxu0
        %v429 = vadd.f32 0.0, %v428
        %430 = vmatmul.bf16.gmra.mxu0 %v410
        %v431 = vpop.f32.mrf.mxu0
        %v432 = vadd.f32 0.0, %v431
        %v433 = vpop.f32.mrf.mxu0
        %434 = vdwg.mxu0
        %435 = vst [vmem:[#allocation2] sm:$0xff] %v422
        %436 = vst [vmem:[#allocation2 + $0x8] sm:$0xff] %v424
        %437 = vst [vmem:[#allocation2 + $0x10] sm:$0xff] %v427
        %438 = vst [vmem:[#allocation2 + $0x18] sm:$0xff] %v429
        %439 = vst [vmem:[#allocation2 + $0x20] sm:$0xff] %v432
        %v440 = vld [vmem:[%s360] sm:$0xe]
        %v441 = vld [vmem:[%s360 + $0x4] sm:$0xf]
        %v442 = vld [vmem:[%s360 + $0x8] sm:$0xf]
        %v443 = vld [vmem:[%s360 + $0xc] sm:$0xf]
        %v444 = vld [vmem:[%s360 + $0x10] sm:$0xf]
        %v445 = vld [vmem:[%s360 + $0x14] sm:$0x1]
        %v446 = vld [vmem:[#allocation2] sm:$0xff]
        %v447 = vld [vmem:[#allocation2 + $0x8] sm:$0xff]
        %v448 = vld [vmem:[#allocation2 + $0x10] sm:$0xff]
        %v449 = vld [vmem:[#allocation2 + $0x18] sm:$0xff]
        %v450 = vld [vmem:[#allocation2 + $0x20] sm:$0xff]
        %v451 = vld [vmem:[%s6] sm:$0xf]
        %v452 = vld [vmem:[%s6 + $0x4] sm:$0xf]
        %v453 = vld [vmem:[%s6 + $0x8] sm:$0xf]
        %v454 = vld [vmem:[%s6 + $0xc] sm:$0xf]
        %v461 = vunpack.c.l.b16 %v440
        %v462 = vunpack.c.l.b16 %v441
        %v463 = vunpack.c.l.b16 %v442
        %v464 = vunpack.c.l.b16 %v443
        %v465 = vunpack.c.l.b16 %v444
        %v466 = vunpack.c.l.b16 %v445
        %v467 = vpack.c.b16 %v462, %v461
        %v468 = vpack.c.b16 %v464, %v463
        %v469 = vpack.c.b16 %v466, %v465
        %vm470 = vcmask 1046528
        %v471 = vrot.slane %v467, 1
        %v472 = vrot.slane %v468, 1
        %v473 = vsel %vm470, %v471, %v472
        %v474 = vrot.slane %v469, 1
        %v475 = vsel %vm470, %v472, %v474
        %v480 = vunpack.c.l.b16 %v451
        %v481 = vunpack.c.l.b16 %v452
        %v482 = vunpack.c.l.b16 %v453
        %v483 = vunpack.c.l.b16 %v454
        %v484 = vpack.c.b16 %v481, %v480
        %v485 = vpack.c.b16 %v483, %v482
        %v489 = vsel %vm402, %v473, 0
        %v492 = vsel %vm402, %v475, 0
        %v495 = vsel %vm402, %v474, 0
        %497 = vmatpush.bf16.msra.mxu0 0
        %498 = vmatpush.bf16.msra.mxu0 0
        %499 = vmatpush.bf16.msra.mxu0 0
        %500 = vmatpush.bf16.msra.mxu0 0
        %501 = vmatpush.bf16.msra.mxu0 0
        %502 = vmatpush.bf16.msra.mxu0 0
        %503 = vmatpush.bf16.msra.mxu0 %v485
        %504 = vmatpush.bf16.msra.mxu0 %v484
        %505 = vmatmul.bf16.gmra.mxu0 %v489
        %v506 = vpop.f32.mrf.mxu0
        %v507 = vadd.f32 0.0, %v506
        %v508 = vpop.f32.mrf.mxu0
        %v509 = vadd.f32 0.0, %v508
        %510 = vmatmul.bf16.gmra.mxu0 %v492
        %v511 = vpop.f32.mrf.mxu0
        %v512 = vadd.f32 0.0, %v511
        %v513 = vpop.f32.mrf.mxu0
        %v514 = vadd.f32 0.0, %v513
        %515 = vmatmul.bf16.gmra.mxu0 %v495
        %v516 = vpop.f32.mrf.mxu0
        %v517 = vadd.f32 0.0, %v516
        %v518 = vpop.f32.mrf.mxu0
        %519 = vdwg.mxu0
        %v520 = vadd.f32 %v446, %v507
        %v521 = vadd.f32 %v447, %v509
        %v522 = vadd.f32 %v448, %v512
        %v523 = vadd.f32 %v449, %v514
        %v524 = vadd.f32 %v450, %v517
        %525 = vst [vmem:[#allocation2] sm:$0xff] %v520
        %526 = vst [vmem:[#allocation2 + $0x8] sm:$0xff] %v521
        %527 = vst [vmem:[#allocation2 + $0x10] sm:$0xff] %v522
        %528 = vst [vmem:[#allocation2 + $0x18] sm:$0xff] %v523
        %529 = vst [vmem:[#allocation2 + $0x20] sm:$0xff] %v524
        %v530 = vld [vmem:[%s360 + $0x4] sm:$0xe]
        %v531 = vld [vmem:[%s360 + $0x8] sm:$0xf]
        %v532 = vld [vmem:[%s360 + $0xc] sm:$0xf]
        %v533 = vld [vmem:[%s360 + $0x10] sm:$0xf]
        %v534 = vld [vmem:[%s360 + $0x14] sm:$0xf]
        %v535 = vld [vmem:[%s360 + $0x18] sm:$0x1]
        %s536 = scalar_lea.vmem %s5, 16
        %v537 = vld [vmem:[%s536] sm:$0xf]
        %v538 = vld [vmem:[%s536 + $0x4] sm:$0xf]
        %v539 = vld [vmem:[%s536 + $0x8] sm:$0xf]
        %v540 = vld [vmem:[%s536 + $0xc] sm:$0xf]
        %v547 = vunpack.c.l.b16 %v530
        %v548 = vunpack.c.l.b16 %v531
        %v549 = vunpack.c.l.b16 %v532
        %v550 = vunpack.c.l.b16 %v533
        %v551 = vunpack.c.l.b16 %v534
        %v552 = vunpack.c.l.b16 %v535
        %v553 = vpack.c.b16 %v548, %v547
        %v554 = vpack.c.b16 %v550, %v549
        %v555 = vpack.c.b16 %v552, %v551
        %v556 = vrot.slane %v553, 1
        %v557 = vrot.slane %v554, 1
        %v558 = vsel %vm470, %v556, %v557
        %v559 = vrot.slane %v555, 1
        %v560 = vsel %vm470, %v557, %v559
        %v565 = vunpack.c.l.b16 %v537
        %v566 = vunpack.c.l.b16 %v538
        %v567 = vunpack.c.l.b16 %v539
        %v568 = vunpack.c.l.b16 %v540
        %v569 = vpack.c.b16 %v566, %v565
        %v570 = vpack.c.b16 %v568, %v567
        %v574 = vsel %vm402, %v558, 0
        %v577 = vsel %vm402, %v560, 0
        %v580 = vsel %vm402, %v559, 0
        %582 = vmatpush.bf16.msra.mxu0 0
        %583 = vmatpush.bf16.msra.mxu0 0
        %584 = vmatpush.bf16.msra.mxu0 0
        %585 = vmatpush.bf16.msra.mxu0 0
        %586 = vmatpush.bf16.msra.mxu0 0
        %587 = vmatpush.bf16.msra.mxu0 0
        %588 = vmatpush.bf16.msra.mxu0 %v570
        %589 = vmatpush.bf16.msra.mxu0 %v569
        %590 = vmatmul.bf16.gmra.mxu0 %v574
        %v591 = vpop.f32.mrf.mxu0
        %v592 = vadd.f32 0.0, %v591
        %v593 = vpop.f32.mrf.mxu0
        %v594 = vadd.f32 0.0, %v593
        %595 = vmatmul.bf16.gmra.mxu0 %v577
        %v596 = vpop.f32.mrf.mxu0
        %v597 = vadd.f32 0.0, %v596
        %v598 = vpop.f32.mrf.mxu0
        %v599 = vadd.f32 0.0, %v598
        %600 = vmatmul.bf16.gmra.mxu0 %v580
        %v601 = vpop.f32.mrf.mxu0
        %v602 = vadd.f32 0.0, %v601
        %v603 = vpop.f32.mrf.mxu0
        %604 = vdwg.mxu0
        %v605 = vld [vmem:[#allocation2] sm:$0xff]
        %v606 = vld [vmem:[#allocation2 + $0x8] sm:$0xff]
        %v607 = vld [vmem:[#allocation2 + $0x10] sm:$0xff]
        %v608 = vld [vmem:[#allocation2 + $0x18] sm:$0xff]
        %v609 = vld [vmem:[#allocation2 + $0x20] sm:$0xff]
        %v610 = vadd.f32 %v605, %v592
        %v611 = vadd.f32 %v606, %v594
        %v612 = vadd.f32 %v607, %v597
        %v613 = vadd.f32 %v608, %v599
        %v614 = vadd.f32 %v609, %v602
        %615 = vst [vmem:[#allocation2] sm:$0xff] %v610
        %616 = vst [vmem:[#allocation2 + $0x8] sm:$0xff] %v611
        %617 = vst [vmem:[#allocation2 + $0x10] sm:$0xff] %v612
        %618 = vst [vmem:[#allocation2 + $0x18] sm:$0xff] %v613
        %619 = vst [vmem:[#allocation2 + $0x20] sm:$0xff] %v614
        %v620 = vld [vmem:[%s360 + $0x4] sm:$0xc]
        %v621 = vld [vmem:[%s360 + $0x8] sm:$0xf]
        %v622 = vld [vmem:[%s360 + $0xc] sm:$0xf]
        %v623 = vld [vmem:[%s360 + $0x10] sm:$0xf]
        %v624 = vld [vmem:[%s360 + $0x14] sm:$0xf]
        %v625 = vld [vmem:[%s360 + $0x18] sm:$0x3]
        %v626 = vld [vmem:[#allocation2] sm:$0xff]
        %v627 = vld [vmem:[#allocation2 + $0x8] sm:$0xff]
        %v628 = vld [vmem:[#allocation2 + $0x10] sm:$0xff]
        %v629 = vld [vmem:[#allocation2 + $0x18] sm:$0xff]
        %v630 = vld [vmem:[#allocation2 + $0x20] sm:$0xff]
        %s631 = scalar_lea.vmem %s6, 16
        %v632 = vld [vmem:[%s631] sm:$0xf]
        %v633 = vld [vmem:[%s631 + $0x4] sm:$0xf]
        %v634 = vld [vmem:[%s631 + $0x8] sm:$0xf]
        %v635 = vld [vmem:[%s631 + $0xc] sm:$0xf]
        %v642 = vunpack.c.l.b16 %v620
        %v643 = vunpack.c.l.b16 %v621
        %v644 = vunpack.c.l.b16 %v622
        %v645 = vunpack.c.l.b16 %v623
        %v646 = vunpack.c.l.b16 %v624
        %v647 = vunpack.c.l.b16 %v625
        %v648 = vpack.c.b16 %v643, %v642
        %v649 = vpack.c.b16 %v645, %v644
        %v650 = vpack.c.b16 %v647, %v646
        %vm651 = vcmask 1045504
        %v652 = vrot.slane %v648, 2
        %v653 = vrot.slane %v649, 2
        %v654 = vsel %vm651, %v652, %v653
        %v655 = vrot.slane %v650, 2
        %v656 = vsel %vm651, %v653, %v655
        %v661 = vunpack.c.l.b16 %v632
        %v662 = vunpack.c.l.b16 %v633
        %v663 = vunpack.c.l.b16 %v634
        %v664 = vunpack.c.l.b16 %v635
        %v665 = vpack.c.b16 %v662, %v661
        %v666 = vpack.c.b16 %v664, %v663
        %v670 = vsel %vm402, %v654, 0
        %v673 = vsel %vm402, %v656, 0
        %v676 = vsel %vm402, %v655, 0
        %678 = vmatpush.bf16.msra.mxu0 0
        %679 = vmatpush.bf16.msra.mxu0 0
        %680 = vmatpush.bf16.msra.mxu0 0
        %681 = vmatpush.bf16.msra.mxu0 0
        %682 = vmatpush.bf16.msra.mxu0 0
        %683 = vmatpush.bf16.msra.mxu0 0
        %684 = vmatpush.bf16.msra.mxu0 %v666
        %685 = vmatpush.bf16.msra.mxu0 %v665
        %686 = vmatmul.bf16.gmra.mxu0 %v670
        %v687 = vpop.f32.mrf.mxu0
        %v688 = vadd.f32 0.0, %v687
        %v689 = vpop.f32.mrf.mxu0
        %v690 = vadd.f32 0.0, %v689
        %691 = vmatmul.bf16.gmra.mxu0 %v673
        %v692 = vpop.f32.mrf.mxu0
        %v693 = vadd.f32 0.0, %v692
        %v694 = vpop.f32.mrf.mxu0
        %v695 = vadd.f32 0.0, %v694
        %696 = vmatmul.bf16.gmra.mxu0 %v676
        %v697 = vpop.f32.mrf.mxu0
        %v698 = vadd.f32 0.0, %v697
        %v699 = vpop.f32.mrf.mxu0
        %700 = vdwg.mxu0
        %v701 = vadd.f32 %v626, %v688
        %v702 = vadd.f32 %v627, %v690
        %v703 = vadd.f32 %v628, %v693
        %v704 = vadd.f32 %v629, %v695
        %v705 = vadd.f32 %v630, %v698
        %706 = vst [vmem:[#allocation2] sm:$0xff] %v701
        %707 = vst [vmem:[#allocation2 + $0x8] sm:$0xff] %v702
        %708 = vst [vmem:[#allocation2 + $0x10] sm:$0xff] %v703
        %709 = vst [vmem:[#allocation2 + $0x18] sm:$0xff] %v704
        %710 = vst [vmem:[#allocation2 + $0x20] sm:$0xff] %v705
        %v711 = vld [vmem:[%s360 + $0x8] sm:$0xc]
        %v712 = vld [vmem:[%s360 + $0xc] sm:$0xf]
        %v713 = vld [vmem:[%s360 + $0x10] sm:$0xf]
        %v714 = vld [vmem:[%s360 + $0x14] sm:$0xf]
        %v715 = vld [vmem:[%s360 + $0x18] sm:$0xf]
        %v716 = vld [vmem:[%s360 + $0x1c] sm:$0x3]
        %s717 = scalar_lea.vmem %s5, 32
        %v718 = vld [vmem:[%s717] sm:$0xf]
        %v719 = vld [vmem:[%s717 + $0x4] sm:$0xf]
        %v720 = vld [vmem:[%s717 + $0x8] sm:$0xf]
        %v721 = vld [vmem:[%s717 + $0xc] sm:$0xf]
        %v728 = vunpack.c.l.b16 %v711
        %v729 = vunpack.c.l.b16 %v712
        %v730 = vunpack.c.l.b16 %v713
        %v731 = vunpack.c.l.b16 %v714
        %v732 = vunpack.c.l.b16 %v715
        %v733 = vunpack.c.l.b16 %v716
        %v734 = vpack.c.b16 %v729, %v728
        %v735 = vpack.c.b16 %v731, %v730
        %v736 = vpack.c.b16 %v733, %v732
        %v737 = vrot.slane %v734, 2
        %v738 = vrot.slane %v735, 2
        %v739 = vsel %vm651, %v737, %v738
        %v740 = vrot.slane %v736, 2
        %v741 = vsel %vm651, %v738, %v740
        %v746 = vunpack.c.l.b16 %v718
        %v747 = vunpack.c.l.b16 %v719
        %v748 = vunpack.c.l.b16 %v720
        %v749 = vunpack.c.l.b16 %v721
        %v750 = vpack.c.b16 %v747, %v746
        %v751 = vpack.c.b16 %v749, %v748
        %v755 = vsel %vm402, %v739, 0
        %v758 = vsel %vm402, %v741, 0
        %v761 = vsel %vm402, %v740, 0
        %763 = vmatpush.bf16.msra.mxu0 0
        %764 = vmatpush.bf16.msra.mxu0 0
        %765 = vmatpush.bf16.msra.mxu0 0
        %766 = vmatpush.bf16.msra.mxu0 0
        %767 = vmatpush.bf16.msra.mxu0 0
        %768 = vmatpush.bf16.msra.mxu0 0
        %769 = vmatpush.bf16.msra.mxu0 %v751
        %770 = vmatpush.bf16.msra.mxu0 %v750
        %771 = vmatmul.bf16.gmra.mxu0 %v755
        %v772 = vpop.f32.mrf.mxu0
        %v773 = vadd.f32 0.0, %v772
        %v774 = vpop.f32.mrf.mxu0
        %v775 = vadd.f32 0.0, %v774
        %776 = vmatmul.bf16.gmra.mxu0 %v758
        %v777 = vpop.f32.mrf.mxu0
        %v778 = vadd.f32 0.0, %v777
        %v779 = vpop.f32.mrf.mxu0
        %v780 = vadd.f32 0.0, %v779
        %781 = vmatmul.bf16.gmra.mxu0 %v761
        %v782 = vpop.f32.mrf.mxu0
        %v783 = vadd.f32 0.0, %v782
        %v784 = vpop.f32.mrf.mxu0
        %785 = vdwg.mxu0
        %v786 = vld [vmem:[#allocation2] sm:$0xff]
        %v787 = vld [vmem:[#allocation2 + $0x8] sm:$0xff]
        %v788 = vld [vmem:[#allocation2 + $0x10] sm:$0xff]
        %v789 = vld [vmem:[#allocation2 + $0x18] sm:$0xff]
        %v790 = vld [vmem:[#allocation2 + $0x20] sm:$0xff]
        %v791 = vadd.f32 %v786, %v773
        %v792 = vadd.f32 %v787, %v775
        %v793 = vadd.f32 %v788, %v778
        %v794 = vadd.f32 %v789, %v780
        %v795 = vadd.f32 %v790, %v783
        %796 = vst [vmem:[#allocation2] sm:$0xff] %v791
        %797 = vst [vmem:[#allocation2 + $0x8] sm:$0xff] %v792
        %798 = vst [vmem:[#allocation2 + $0x10] sm:$0xff] %v793
        %799 = vst [vmem:[#allocation2 + $0x18] sm:$0xff] %v794
        %800 = vst [vmem:[#allocation2 + $0x20] sm:$0xff] %v795
        %v801 = vld [vmem:[%s360 + $0x8] sm:$0x8]
        %v802 = vld [vmem:[%s360 + $0xc] sm:$0xf]
        %v803 = vld [vmem:[%s360 + $0x10] sm:$0xf]
        %v804 = vld [vmem:[%s360 + $0x14] sm:$0xf]
        %v805 = vld [vmem:[%s360 + $0x18] sm:$0xf]
        %v806 = vld [vmem:[%s360 + $0x1c] sm:$0x7]
        %v807 = vld [vmem:[#allocation2] sm:$0xff]
        %v808 = vld [vmem:[#allocation2 + $0x8] sm:$0xff]
        %v809 = vld [vmem:[#allocation2 + $0x10] sm:$0xff]
        %v810 = vld [vmem:[#allocation2 + $0x18] sm:$0xff]
        %v811 = vld [vmem:[#allocation2 + $0x20] sm:$0xff]
        %s812 = scalar_lea.vmem %s6, 32
        %v813 = vld [vmem:[%s812] sm:$0xf]
        %v814 = vld [vmem:[%s812 + $0x4] sm:$0xf]
        %v815 = vld [vmem:[%s812 + $0x8] sm:$0xf]
        %v816 = vld [vmem:[%s812 + $0xc] sm:$0xf]
        %v823 = vunpack.c.l.b16 %v801
        %v824 = vunpack.c.l.b16 %v802
        %v825 = vunpack.c.l.b16 %v803
        %v826 = vunpack.c.l.b16 %v804
        %v827 = vunpack.c.l.b16 %v805
        %v828 = vunpack.c.l.b16 %v806
        %v829 = vpack.c.b16 %v824, %v823
        %v830 = vpack.c.b16 %v826, %v825
        %v831 = vpack.c.b16 %v828, %v827
        %vm832 = vcmask 1044480
        %v833 = vrot.slane %v829, 3
        %v834 = vrot.slane %v830, 3
        %v835 = vsel %vm832, %v833, %v834
        %v836 = vrot.slane %v831, 3
        %v837 = vsel %vm832, %v834, %v836
        %v842 = vunpack.c.l.b16 %v813
        %v843 = vunpack.c.l.b16 %v814
        %v844 = vunpack.c.l.b16 %v815
        %v845 = vunpack.c.l.b16 %v816
        %v846 = vpack.c.b16 %v843, %v842
        %v847 = vpack.c.b16 %v845, %v844
        %v851 = vsel %vm402, %v835, 0
        %v854 = vsel %vm402, %v837, 0
        %v857 = vsel %vm402, %v836, 0
        %859 = vmatpush.bf16.msra.mxu0 0
        %860 = vmatpush.bf16.msra.mxu0 0
        %861 = vmatpush.bf16.msra.mxu0 0
        %862 = vmatpush.bf16.msra.mxu0 0
        %863 = vmatpush.bf16.msra.mxu0 0
        %864 = vmatpush.bf16.msra.mxu0 0
        %865 = vmatpush.bf16.msra.mxu0 %v847
        %866 = vmatpush.bf16.msra.mxu0 %v846
        %867 = vmatmul.bf16.gmra.mxu0 %v851
        %v868 = vpop.f32.mrf.mxu0
        %v869 = vadd.f32 0.0, %v868
        %v870 = vpop.f32.mrf.mxu0
        %v871 = vadd.f32 0.0, %v870
        %872 = vmatmul.bf16.gmra.mxu0 %v854
        %v873 = vpop.f32.mrf.mxu0
        %v874 = vadd.f32 0.0, %v873
        %v875 = vpop.f32.mrf.mxu0
        %v876 = vadd.f32 0.0, %v875
        %877 = vmatmul.bf16.gmra.mxu0 %v857
        %v878 = vpop.f32.mrf.mxu0
        %v879 = vadd.f32 0.0, %v878
        %v880 = vpop.f32.mrf.mxu0
        %881 = vdwg.mxu0
        %v882 = vadd.f32 %v807, %v869
        %v883 = vadd.f32 %v808, %v871
        %v884 = vadd.f32 %v809, %v874
        %v885 = vadd.f32 %v810, %v876
        %v886 = vadd.f32 %v811, %v879
        %887 = vst [vmem:[#allocation2] sm:$0xff] %v882
        %888 = vst [vmem:[#allocation2 + $0x8] sm:$0xff] %v883
        %889 = vst [vmem:[#allocation2 + $0x10] sm:$0xff] %v884
        %890 = vst [vmem:[#allocation2 + $0x18] sm:$0xff] %v885
        %891 = vst [vmem:[#allocation2 + $0x20] sm:$0xff] %v886
        %v892 = vld [vmem:[%s363] sm:$0x1]
        %v893 = vld [vmem:[%s351 + $0x4] sm:$0xe]
        %v894 = vld [vmem:[%s351 + $0x8] sm:$0xf]
        %v895 = vld [vmem:[%s351 + $0xc] sm:$0xf]
        %v896 = vld [vmem:[%s351 + $0x10] sm:$0xf]
        %v897 = vld [vmem:[%s351 + $0x14] sm:$0xf]
        %v898 = vld [vmem:[%s351 + $0x18] sm:$0x3]
        %v899 = vld [vmem:[#allocation2] sm:$0xff]
        %v900 = vld [vmem:[#allocation2 + $0x8] sm:$0xff]
        %v901 = vld [vmem:[#allocation2 + $0x10] sm:$0xff]
        %v902 = vld [vmem:[#allocation2 + $0x18] sm:$0xff]
        %v903 = vld [vmem:[#allocation2 + $0x20] sm:$0xff]
        %v904 = vld [vmem:[%s4] sm:$0xf]
        %v905 = vld [vmem:[%s4 + $0x4] sm:$0xf]
        %v906 = vld [vmem:[%s4 + $0x8] sm:$0xf]
        %v907 = vld [vmem:[%s4 + $0xc] sm:$0xf]
        %v914 = vunpack.c.l.b16 %v893
        %v915 = vunpack.c.l.b16 %v894
        %v916 = vunpack.c.l.b16 %v895
        %v917 = vunpack.c.l.b16 %v896
        %v918 = vunpack.c.l.b16 %v897
        %v919 = vunpack.c.l.b16 %v898
        %v920 = vpack.c.b16 %v915, %v914
        %v921 = vpack.c.b16 %v917, %v916
        %v922 = vpack.c.b16 %v919, %v918
        %vm923 = vsmask.f32 6400
        %v925 = vshrl.u32 %v920, 16
        %v927 = vrot.slane %v925, 1
        %v928 = vshll.u32 %v920, 16
        %v930 = vrot.slane %v928, 2
        %v931 = vor.u32 %v927, %v930
        %v933 = vshrl.u32 %v921, 16
        %v935 = vrot.slane %v933, 1
        %v936 = vshll.u32 %v921, 16
        %v938 = vrot.slane %v936, 2
        %v939 = vor.u32 %v935, %v938
        %v940 = vsel %vm923, %v931, %v939
        %v942 = vshrl.u32 %v922, 16
        %v944 = vrot.slane %v942, 1
        %v945 = vshll.u32 %v922, 16
        %v947 = vrot.slane %v945, 2
        %v948 = vor.u32 %v944, %v947
        %v949 = vsel %vm923, %v939, %v948
        %v954 = vunpack.c.l.b16 %v904
        %v955 = vunpack.c.l.b16 %v905
        %v956 = vunpack.c.l.b16 %v906
        %v957 = vunpack.c.l.b16 %v907
        %v958 = vpack.c.b16 %v955, %v954
        %v959 = vpack.c.b16 %v957, %v956
        %v963 = vsel %vm402, %v940, 0
        %v966 = vsel %vm402, %v949, 0
        %v969 = vsel %vm402, %v948, 0
        %971 = vmatpush.bf16.msra.mxu0 0
        %972 = vmatpush.bf16.msra.mxu0 0
        %973 = vmatpush.bf16.msra.mxu0 0
        %974 = vmatpush.bf16.msra.mxu0 0
        %975 = vmatpush.bf16.msra.mxu0 0
        %976 = vmatpush.bf16.msra.mxu0 0
        %977 = vmatpush.bf16.msra.mxu0 %v959
        %978 = vmatpush.bf16.msra.mxu0 %v958
        %979 = vmatmul.bf16.gmra.mxu0 %v963
        %v980 = vpop.f32.mrf.mxu0
        %v981 = vadd.f32 0.0, %v980
        %v982 = vpop.f32.mrf.mxu0
        %v983 = vadd.f32 0.0, %v982
        %984 = vmatmul.bf16.gmra.mxu0 %v966
        %v985 = vpop.f32.mrf.mxu0
        %v986 = vadd.f32 0.0, %v985
        %v987 = vpop.f32.mrf.mxu0
        %v988 = vadd.f32 0.0, %v987
        %989 = vmatmul.bf16.gmra.mxu0 %v969
        %v990 = vpop.f32.mrf.mxu0
        %v991 = vadd.f32 0.0, %v990
        %v992 = vpop.f32.mrf.mxu0
        %993 = vdwg.mxu0
        %v995 = vperm.slane %v892, 0
        %v997 = vmul.f32 %v981, %v995
        %v998 = vmul.f32 %v983, %v995
        %v999 = vmul.f32 %v986, %v995
        %v1000 = vmul.f32 %v988, %v995
        %v1001 = vmul.f32 %v991, %v995
        %v1002 = vadd.f32 %v899, %v997
        %v1003 = vadd.f32 %v900, %v998
        %v1004 = vadd.f32 %v901, %v999
        %v1005 = vadd.f32 %v902, %v1000
        %v1006 = vadd.f32 %v903, %v1001
        %1007 = vst [vmem:[#allocation2] sm:$0xff] %v1002
        %1008 = vst [vmem:[#allocation2 + $0x8] sm:$0xff] %v1003
        %1009 = vst [vmem:[#allocation2 + $0x10] sm:$0xff] %v1004
        %1010 = vst [vmem:[#allocation2 + $0x18] sm:$0xff] %v1005
        %1011 = vst [vmem:[#allocation2 + $0x20] sm:$0xff] %v1006
        %v1012 = vld [vmem:[%s351 + $0x4] sm:$0xc]
        %v1013 = vld [vmem:[%s351 + $0x8] sm:$0xf]
        %v1014 = vld [vmem:[%s351 + $0xc] sm:$0xf]
        %v1015 = vld [vmem:[%s351 + $0x10] sm:$0xf]
        %v1016 = vld [vmem:[%s351 + $0x14] sm:$0xf]
        %v1017 = vld [vmem:[%s351 + $0x18] sm:$0x3]
        %v1018 = vld [vmem:[#allocation2] sm:$0xff]
        %v1019 = vld [vmem:[#allocation2 + $0x8] sm:$0xff]
        %v1020 = vld [vmem:[#allocation2 + $0x10] sm:$0xff]
        %v1021 = vld [vmem:[#allocation2 + $0x18] sm:$0xff]
        %v1022 = vld [vmem:[#allocation2 + $0x20] sm:$0xff]
        %s1023 = scalar_lea.vmem %s4, 16
        %v1024 = vld [vmem:[%s1023] sm:$0xf]
        %v1025 = vld [vmem:[%s1023 + $0x4] sm:$0xf]
        %v1026 = vld [vmem:[%s1023 + $0x8] sm:$0xf]
        %v1027 = vld [vmem:[%s1023 + $0xc] sm:$0xf]
        %v1034 = vunpack.c.l.b16 %v1012
        %v1035 = vunpack.c.l.b16 %v1013
        %v1036 = vunpack.c.l.b16 %v1014
        %v1037 = vunpack.c.l.b16 %v1015
        %v1038 = vunpack.c.l.b16 %v1016
        %v1039 = vunpack.c.l.b16 %v1017
        %v1040 = vpack.c.b16 %v1035, %v1034
        %v1041 = vpack.c.b16 %v1037, %v1036
        %v1042 = vpack.c.b16 %v1039, %v1038
        %v1043 = vrot.slane %v1040, 2
        %v1044 = vrot.slane %v1041, 2
        %v1045 = vsel %vm651, %v1043, %v1044
        %v1046 = vrot.slane %v1042, 2
        %v1047 = vsel %vm651, %v1044, %v1046
        %v1052 = vunpack.c.l.b16 %v1024
        %v1053 = vunpack.c.l.b16 %v1025
        %v1054 = vunpack.c.l.b16 %v1026
        %v1055 = vunpack.c.l.b16 %v1027
        %v1056 = vpack.c.b16 %v1053, %v1052
        %v1057 = vpack.c.b16 %v1055, %v1054
        %v1061 = vsel %vm402, %v1045, 0
        %v1064 = vsel %vm402, %v1047, 0
        %v1067 = vsel %vm402, %v1046, 0
        %1069 = vmatpush.bf16.msra.mxu0 0
        %1070 = vmatpush.bf16.msra.mxu0 0
        %1071 = vmatpush.bf16.msra.mxu0 0
        %1072 = vmatpush.bf16.msra.mxu0 0
        %1073 = vmatpush.bf16.msra.mxu0 0
        %1074 = vmatpush.bf16.msra.mxu0 0
        %1075 = vmatpush.bf16.msra.mxu0 %v1057
        %1076 = vmatpush.bf16.msra.mxu0 %v1056
        %1077 = vmatmul.bf16.gmra.mxu0 %v1061
        %v1078 = vpop.f32.mrf.mxu0
        %v1079 = vadd.f32 0.0, %v1078
        %v1080 = vpop.f32.mrf.mxu0
        %v1081 = vadd.f32 0.0, %v1080
        %1082 = vmatmul.bf16.gmra.mxu0 %v1064
        %v1083 = vpop.f32.mrf.mxu0
        %v1084 = vadd.f32 0.0, %v1083
        %v1085 = vpop.f32.mrf.mxu0
        %v1086 = vadd.f32 0.0, %v1085
        %1087 = vmatmul.bf16.gmra.mxu0 %v1067
        %v1088 = vpop.f32.mrf.mxu0
        %v1089 = vadd.f32 0.0, %v1088
        %v1090 = vpop.f32.mrf.mxu0
        %1091 = vdwg.mxu0
        %v1092 = vmul.f32 %v1079, %v995
        %v1093 = vmul.f32 %v1081, %v995
        %v1094 = vmul.f32 %v1084, %v995
        %v1095 = vmul.f32 %v1086, %v995
        %v1096 = vmul.f32 %v1089, %v995
        %v1097 = vadd.f32 %v1018, %v1092
        %v1098 = vadd.f32 %v1019, %v1093
        %v1099 = vadd.f32 %v1020, %v1094
        %v1100 = vadd.f32 %v1021, %v1095
        %v1101 = vadd.f32 %v1022, %v1096
        %1102 = vst [vmem:[#allocation2] sm:$0xff] %v1097
        %1103 = vst [vmem:[#allocation2 + $0x8] sm:$0xff] %v1098
        %1104 = vst [vmem:[#allocation2 + $0x10] sm:$0xff] %v1099
        %1105 = vst [vmem:[#allocation2 + $0x18] sm:$0xff] %v1100
        %1106 = vst [vmem:[#allocation2 + $0x20] sm:$0xff] %v1101
        %v1107 = vld [vmem:[%s351 + $0x8] sm:$0xc]
        %v1108 = vld [vmem:[%s351 + $0xc] sm:$0xf]
        %v1109 = vld [vmem:[%s351 + $0x10] sm:$0xf]
        %v1110 = vld [vmem:[%s351 + $0x14] sm:$0xf]
        %v1111 = vld [vmem:[%s351 + $0x18] sm:$0xf]
        %v1112 = vld [vmem:[%s351 + $0x1c] sm:$0x7]
        %v1113 = vld [vmem:[#allocation2] sm:$0xff]
        %v1114 = vld [vmem:[#allocation2 + $0x8] sm:$0xff]
        %v1115 = vld [vmem:[#allocation2 + $0x10] sm:$0xff]
        %v1116 = vld [vmem:[#allocation2 + $0x18] sm:$0xff]
        %v1117 = vld [vmem:[#allocation2 + $0x20] sm:$0xff]
        %s1118 = scalar_lea.vmem %s4, 32
        %v1119 = vld [vmem:[%s1118] sm:$0xf]
        %v1120 = vld [vmem:[%s1118 + $0x4] sm:$0xf]
        %v1121 = vld [vmem:[%s1118 + $0x8] sm:$0xf]
        %v1122 = vld [vmem:[%s1118 + $0xc] sm:$0xf]
        %v1129 = vunpack.c.l.b16 %v1107
        %v1130 = vunpack.c.l.b16 %v1108
        %v1131 = vunpack.c.l.b16 %v1109
        %v1132 = vunpack.c.l.b16 %v1110
        %v1133 = vunpack.c.l.b16 %v1111
        %v1134 = vunpack.c.l.b16 %v1112
        %v1135 = vpack.c.b16 %v1130, %v1129
        %v1136 = vpack.c.b16 %v1132, %v1131
        %v1137 = vpack.c.b16 %v1134, %v1133
        %vm1138 = vsmask.f32 5376
        %v1140 = vshrl.u32 %v1135, 16
        %v1142 = vrot.slane %v1140, 2
        %v1143 = vshll.u32 %v1135, 16
        %v1145 = vrot.slane %v1143, 3
        %v1146 = vor.u32 %v1142, %v1145
        %v1148 = vshrl.u32 %v1136, 16
        %v1150 = vrot.slane %v1148, 2
        %v1151 = vshll.u32 %v1136, 16
        %v1153 = vrot.slane %v1151, 3
        %v1154 = vor.u32 %v1150, %v1153
        %v1155 = vsel %vm1138, %v1146, %v1154
        %v1157 = vshrl.u32 %v1137, 16
        %v1159 = vrot.slane %v1157, 2
        %v1160 = vshll.u32 %v1137, 16
        %v1162 = vrot.slane %v1160, 3
        %v1163 = vor.u32 %v1159, %v1162
        %v1164 = vsel %vm1138, %v1154, %v1163
        %v1169 = vunpack.c.l.b16 %v1119
        %v1170 = vunpack.c.l.b16 %v1120
        %v1171 = vunpack.c.l.b16 %v1121
        %v1172 = vunpack.c.l.b16 %v1122
        %v1173 = vpack.c.b16 %v1170, %v1169
        %v1174 = vpack.c.b16 %v1172, %v1171
        %v1178 = vsel %vm402, %v1155, 0
        %v1181 = vsel %vm402, %v1164, 0
        %v1184 = vsel %vm402, %v1163, 0
        %1186 = vmatpush.bf16.msra.mxu0 0
        %1187 = vmatpush.bf16.msra.mxu0 0
        %1188 = vmatpush.bf16.msra.mxu0 0
        %1189 = vmatpush.bf16.msra.mxu0 0
        %1190 = vmatpush.bf16.msra.mxu0 0
        %1191 = vmatpush.bf16.msra.mxu0 0
        %1192 = vmatpush.bf16.msra.mxu0 %v1174
        %1193 = vmatpush.bf16.msra.mxu0 %v1173
        %1194 = vmatmul.bf16.gmra.mxu0 %v1178
        %v1195 = vpop.f32.mrf.mxu0
        %v1196 = vadd.f32 0.0, %v1195
        %v1197 = vpop.f32.mrf.mxu0
        %v1198 = vadd.f32 0.0, %v1197
        %1199 = vmatmul.bf16.gmra.mxu0 %v1181
        %v1200 = vpop.f32.mrf.mxu0
        %v1201 = vadd.f32 0.0, %v1200
        %v1202 = vpop.f32.mrf.mxu0
        %v1203 = vadd.f32 0.0, %v1202
        %1204 = vmatmul.bf16.gmra.mxu0 %v1184
        %v1205 = vpop.f32.mrf.mxu0
        %v1206 = vadd.f32 0.0, %v1205
        %v1207 = vpop.f32.mrf.mxu0
        %1208 = vdwg.mxu0
        %v1209 = vmul.f32 %v1196, %v995
        %v1210 = vmul.f32 %v1198, %v995
        %v1211 = vmul.f32 %v1201, %v995
        %v1212 = vmul.f32 %v1203, %v995
        %v1213 = vmul.f32 %v1206, %v995
        %v1214 = vadd.f32 %v1113, %v1209
        %v1215 = vadd.f32 %v1114, %v1210
        %v1216 = vadd.f32 %v1115, %v1211
        %v1217 = vadd.f32 %v1116, %v1212
        %v1218 = vadd.f32 %v1117, %v1213
        %1219 = vst [vmem:[#allocation2] sm:$0xff] %v1214
        %1220 = vst [vmem:[#allocation2 + $0x8] sm:$0xff] %v1215
        %1221 = vst [vmem:[#allocation2 + $0x10] sm:$0xff] %v1216
        %1222 = vst [vmem:[#allocation2 + $0x18] sm:$0xff] %v1217
        %1223 = vst [vmem:[#allocation2 + $0x20] sm:$0xff] %v1218
        %v1224 = vld [vmem:[%s351 + $0x8] sm:$0x8]
        %v1225 = vld [vmem:[%s351 + $0xc] sm:$0xf]
        %v1226 = vld [vmem:[%s351 + $0x10] sm:$0xf]
        %v1227 = vld [vmem:[%s351 + $0x14] sm:$0xf]
        %v1228 = vld [vmem:[%s351 + $0x18] sm:$0xf]
        %v1229 = vld [vmem:[%s351 + $0x1c] sm:$0x7]
        %v1230 = vld [vmem:[#allocation2] sm:$0xff]
        %v1231 = vld [vmem:[#allocation2 + $0x8] sm:$0xff]
        %v1232 = vld [vmem:[#allocation2 + $0x10] sm:$0xff]
        %v1233 = vld [vmem:[#allocation2 + $0x18] sm:$0xff]
        %v1234 = vld [vmem:[#allocation2 + $0x20] sm:$0xff]
        %s1235 = scalar_lea.vmem %s4, 48
        %v1236 = vld [vmem:[%s1235] sm:$0xf]
        %v1237 = vld [vmem:[%s1235 + $0x4] sm:$0xf]
        %v1238 = vld [vmem:[%s1235 + $0x8] sm:$0xf]
        %v1239 = vld [vmem:[%s1235 + $0xc] sm:$0xf]
        %v1246 = vunpack.c.l.b16 %v1224
        %v1247 = vunpack.c.l.b16 %v1225
        %v1248 = vunpack.c.l.b16 %v1226
        %v1249 = vunpack.c.l.b16 %v1227
        %v1250 = vunpack.c.l.b16 %v1228
        %v1251 = vunpack.c.l.b16 %v1229
        %v1252 = vpack.c.b16 %v1247, %v1246
        %v1253 = vpack.c.b16 %v1249, %v1248
        %v1254 = vpack.c.b16 %v1251, %v1250
        %v1255 = vrot.slane %v1252, 3
        %v1256 = vrot.slane %v1253, 3
        %v1257 = vsel %vm832, %v1255, %v1256
        %v1258 = vrot.slane %v1254, 3
        %v1259 = vsel %vm832, %v1256, %v1258
        %v1264 = vunpack.c.l.b16 %v1236
        %v1265 = vunpack.c.l.b16 %v1237
        %v1266 = vunpack.c.l.b16 %v1238
        %v1267 = vunpack.c.l.b16 %v1239
        %v1268 = vpack.c.b16 %v1265, %v1264
        %v1269 = vpack.c.b16 %v1267, %v1266
        %v1273 = vsel %vm402, %v1257, 0
        %v1276 = vsel %vm402, %v1259, 0
        %v1279 = vsel %vm402, %v1258, 0
        %1281 = vmatpush.bf16.msra.mxu0 0
        %1282 = vmatpush.bf16.msra.mxu0 0
        %1283 = vmatpush.bf16.msra.mxu0 0
        %1284 = vmatpush.bf16.msra.mxu0 0
        %1285 = vmatpush.bf16.msra.mxu0 0
        %1286 = vmatpush.bf16.msra.mxu0 0
        %1287 = vmatpush.bf16.msra.mxu0 %v1269
        %1288 = vmatpush.bf16.msra.mxu0 %v1268
        %1289 = vmatmul.bf16.gmra.mxu0 %v1273
        %v1290 = vpop.f32.mrf.mxu0
        %v1291 = vadd.f32 0.0, %v1290
        %v1292 = vpop.f32.mrf.mxu0
        %v1293 = vadd.f32 0.0, %v1292
        %1294 = vmatmul.bf16.gmra.mxu0 %v1276
        %v1295 = vpop.f32.mrf.mxu0
        %v1296 = vadd.f32 0.0, %v1295
        %v1297 = vpop.f32.mrf.mxu0
        %v1298 = vadd.f32 0.0, %v1297
        %1299 = vmatmul.bf16.gmra.mxu0 %v1279
        %v1300 = vpop.f32.mrf.mxu0
        %v1301 = vadd.f32 0.0, %v1300
        %v1302 = vpop.f32.mrf.mxu0
        %1303 = vdwg.mxu0
        %v1304 = vmul.f32 %v1291, %v995
        %v1305 = vmul.f32 %v1293, %v995
        %v1306 = vmul.f32 %v1296, %v995
        %v1307 = vmul.f32 %v1298, %v995
        %v1308 = vmul.f32 %v1301, %v995
        %v1309 = vadd.f32 %v1230, %v1304
        %v1310 = vadd.f32 %v1231, %v1305
        %v1311 = vadd.f32 %v1232, %v1306
        %v1312 = vadd.f32 %v1233, %v1307
        %v1313 = vadd.f32 %v1234, %v1308
        %1314 = vst [vmem:[#allocation2] sm:$0xff] %v1309
        %1315 = vst [vmem:[#allocation2 + $0x8] sm:$0xff] %v1310
        %1316 = vst [vmem:[#allocation2 + $0x10] sm:$0xff] %v1311
        %1317 = vst [vmem:[#allocation2 + $0x18] sm:$0xff] %v1312
        %1318 = vst [vmem:[#allocation2 + $0x20] sm:$0xff] %v1313
        %v1319 = vld [vmem:[#allocation2] sm:$0xff]
        %v1320 = vld [vmem:[#allocation2 + $0x8] sm:$0xff]
        %v1321 = vld [vmem:[#allocation2 + $0x10] sm:$0xff]
        %v1322 = vld [vmem:[#allocation2 + $0x18] sm:$0xff]
        %v1323 = vld [vmem:[#allocation2 + $0x20] sm:$0xff]
        %v1324 = vld [vmem:[%s366] sm:$0x1]
        %v1326 = vperm.slane %v1324, 0
        %v1328 = vadd.f32 %v1319, %v1326
        %v1329 = vadd.f32 %v1320, %v1326
        %v1330 = vadd.f32 %v1321, %v1326
        %v1331 = vadd.f32 %v1322, %v1326
        %v1332 = vadd.f32 %v1323, %v1326
        %v1333 = vmax.f32 %v1328, 0.0
        %v1334 = vmax.f32 %v1329, 0.0
        %v1335 = vmax.f32 %v1330, 0.0
        %v1336 = vmax.f32 %v1331, 0.0
        %v1337 = vmax.f32 %v1332, 0.0
        %v1338 = vpack.c.bf16 %v1333, %v1333
        %v1339 = vpack.c.bf16 %v1334, %v1334
        %v1340 = vpack.c.bf16 %v1335, %v1335
        %v1341 = vpack.c.bf16 %v1336, %v1336
        %v1342 = vpack.c.bf16 %v1337, %v1337
        %1343 = vst [vmem:[%s342] sm:$0xf] %v1338
        %1344 = vst [vmem:[%s342 + $0x4] sm:$0xf] %v1339
        %1345 = vst [vmem:[%s342 + $0x8] sm:$0xf] %v1340
        %1346 = vst [vmem:[%s342 + $0xc] sm:$0xf] %v1341
        %1347 = vst [vmem:[%s342 + $0x10] sm:$0xf] %v1342
        %s1348 = sand.u32 %s214, 1
        %s1349 = scalar_lea.sflag [#allocation4], %s1348
        %s1350 = sand.u32 %s214, 1
        %s1351 = smul.addr %s1350, 20
        %s1352 = scalar_lea.vmem [#allocation3], %s1351
        // Predicated region
        $region49: #{tpu_custom_call.1} parent=47 // pred_check
          %p1353 = pneg %p224
        $region50: #{tpu_custom_call.1} parent=47 // pred_check_branch
          %1355 = sbr.rel (%p1353) target = $region52
        $region51: #{tpu_custom_call.1} parent=47 // pred_region
          %1357 = vsyncadd %s1349, 0
          %s1358 = smul.addr %s26, 5
          %s1359 = smul.addr %s25, 10
          %s1360 = sadd.s32 %s1358, %s1359
          %s1361 = smul.addr %s1360, 4
          %s1362 = scalar_lea.hbm %s7, %s1361
          %s1363 = sshll.u32 %s1352, 4
          %s1364 = int_to_ptr.vmem [resolvable:$true] %s1363
          %s1365 = sshll.u32 %s1362, 4
          %s1366 = int_to_ptr.hbm [resolvable:$true] %s1365
          %1371 = dma.vmem_to_hbm [thread:$0]  %s1364, 320, %s1366, %s1349, 64, 64, 4
        $region52: #{tpu_custom_call.1} parent=47 // pred_fallthru
          _
      $region48: #{tpu_custom_call.1} parent=5 // pred_fallthru
        _
      %p1372 = scmp.le.s32.totalorder 2, %s16
      // Predicated region
      $region53: #{tpu_custom_call.1} parent=5 // pred_check
        %p1373 = pneg %p1372
      $region54: #{tpu_custom_call.1} parent=5 // pred_check_branch
        %1375 = sbr.rel (%p1373) target = $region56
      $region55: #{tpu_custom_call.1} parent=5 // pred_region
        %s1376 = ssub.s32 %s16, 2
        // Predicated region
        $region57: #{tpu_custom_call.1} parent=55 // pred_check
          %p1377 = pneg %p230
        $region58: #{tpu_custom_call.1} parent=55 // pred_check_branch
          %1379 = sbr.rel (%p1377) target = $region60
        $region59: #{tpu_custom_call.1} parent=55 // pred_region
          %s1380 = sand.u32 %s215, 1
          %s1381 = scalar_lea.sflag [#allocation4], %s1380
          %s1382 = sand.u32 %s215, 1
          %s1383 = smul.addr %s1382, 20
          %s1384 = scalar_lea.vmem [#allocation3], %s1383
          %1386 = dma.done %s1381, 320
        $region60: #{tpu_custom_call.1} parent=55 // pred_fallthru
          _
      $region56: #{tpu_custom_call.1} parent=5 // pred_fallthru
        _
    $region6: #{tpu_custom_call.1} parent=1 // loop_footer
      %s20 = sadd.s32 1, %s16
    $region7: #{tpu_custom_call.1} parent=1 // loop_footer_branch
      %15 = sbr.rel target = $region3
    $region8: #{tpu_custom_call.1} parent=1 // loop_exit
      _
    %1387 = vsyncpa [#allocation4], 1
    %s1388 = scalar_lea.sflag [#allocation4], 1
    %1389 = vsyncpa %s1388, 1

</llo_original>
